<compile_context>
chip_gen: v7x
topology: tpu7x:2x2x1
jax: 0.10.0
libtpu: 0.0.40
codegen_flags: <defaults>
</compile_context>

<pallas_src>
import math
import jax
import jax.numpy as jnp
from jax.experimental import pallas as pl
from jax.experimental.pallas import tpu as pltpu


def ffn_kernel(x_ref, w1_ref, b1_ref, w2_ref, b2_ref, g_ref, beta_ref,
               o_ref, xn_ref, acc_ref):
    h = pl.program_id(1)

    @pl.when(h == 0)
    def _():
        # LayerNorm over the embed (last) dim, eps=1e-5 (torch default),
        # computed once per row tile; cached in bf16 for the MXU.
        x = x_ref[...]
        mean = jnp.mean(x, axis=-1, keepdims=True)
        cent = x - mean
        var = jnp.mean(cent * cent, axis=-1, keepdims=True)
        xn = cent * jax.lax.rsqrt(var + 1e-5)
        xn = xn * g_ref[...] + beta_ref[...]
        xn_ref[...] = xn.astype(jnp.bfloat16)
        acc_ref[...] = jnp.zeros_like(acc_ref)

    # fc1 hidden slice -> bias -> relu (relu_dropout = identity in eval mode)
    h1 = jnp.dot(xn_ref[...], w1_ref[...],
                 preferred_element_type=jnp.float32) + b1_ref[...]
    h1 = jnp.maximum(h1, 0.0)

    # partial fc2: accumulate over hidden tiles in f32
    acc_ref[...] += jnp.dot(h1.astype(jnp.bfloat16), w2_ref[...],
                            preferred_element_type=jnp.float32)

    @pl.when(h == pl.num_programs(1) - 1)
    def _():
        # fc2 bias + residual (res_dropout = identity in eval mode)
        o_ref[...] = x_ref[...] + acc_ref[...] + b2_ref[...]


def ffn_pallas(x, w1, b1, w2, b2, gamma, beta, *, tm=256, th=512):
    """x: (seq, batch, embed) float32. w1/w2 are bf16, (in, out). Returns x's shape."""
    seq, bsz, d = x.shape
    hid = w1.shape[1]
    n = seq * bsz

    # hidden-dim tile: must divide hid; fall back to fully-resident if it doesn't.
    th = min(th, hid)
    if hid % th != 0:
        th = hid

    # pad the token count up to the row tile (padding rows are benign: LN of a
    # zero row is finite, and the rows are sliced off afterwards).
    n_pad = pl.cdiv(n, tm) * tm
    xf = x.reshape(n, d).astype(jnp.float32)
    if n_pad != n:
        xf = jnp.pad(xf, ((0, n_pad - n), (0, 0)))

    grid = (n_pad // tm, hid // th)

    flops = 4 * n_pad * d * hid                      # two matmuls, 2 flops/MAC
    bytes_accessed = (2 * n_pad * d * 4              # x in + out (f32)
                      + 2 * d * hid * 2              # bf16 W1 + W2
                      + (2 * hid + 6 * d) * 4)       # biases + LN params

    out = pl.pallas_call(
        ffn_kernel,
        out_shape=jax.ShapeDtypeStruct((n_pad, d), jnp.float32),
        grid_spec=pltpu.PrefetchScalarGridSpec(
            num_scalar_prefetch=0,
            grid=grid,
            in_specs=[
                pl.BlockSpec((tm, d), lambda i, h: (i, 0)),    # x row tile (f32)
                pl.BlockSpec((d, th), lambda i, h: (0, h)),    # W1 (in, out) bf16
                pl.BlockSpec((1, th), lambda i, h: (0, h)),    # b1 (f32)
                pl.BlockSpec((th, d), lambda i, h: (h, 0)),    # W2 (in, out) bf16
                pl.BlockSpec((1, d), lambda i, h: (0, 0)),     # b2 (f32)
                pl.BlockSpec((1, d), lambda i, h: (0, 0)),     # LN gamma
                pl.BlockSpec((1, d), lambda i, h: (0, 0)),     # LN beta
            ],
            out_specs=pl.BlockSpec((tm, d), lambda i, h: (i, 0)),
            scratch_shapes=[
                pltpu.VMEM((tm, d), jnp.bfloat16),   # cached LayerNorm output
                pltpu.VMEM((tm, d), jnp.float32),    # fc2 accumulator
            ],
        ),
        compiler_params=pltpu.CompilerParams(
            dimension_semantics=("parallel", "arbitrary"),
            vmem_limit_bytes=48 * 1024 * 1024,       # headroom under 64 MiB (v7x)
        ),
        cost_estimate=pl.CostEstimate(
            flops=flops, transcendentals=n_pad, bytes_accessed=bytes_accessed),
    )(xf, w1, b1, w2, b2, gamma, beta)

    return out[:n].reshape(seq, bsz, d)


def init_params(key, embed_dim):
    """Deterministic params matching FFN.__init__ (xavier_uniform weights, zero bias)."""
    hid = 4 * embed_dim
    k1, k2 = jax.random.split(key)
    # torch xavier_uniform_ on weight (out, in): bound = sqrt(6 / (in + out))
    bound1 = math.sqrt(6.0 / (embed_dim + hid))
    bound2 = math.sqrt(6.0 / (hid + embed_dim))
    # stored transposed (in, out), bf16 for the MXU
    w1 = jax.random.uniform(k1, (embed_dim, hid), jnp.float32,
                            -bound1, bound1).astype(jnp.bfloat16)
    w2 = jax.random.uniform(k2, (hid, embed_dim), jnp.float32,
                            -bound2, bound2).astype(jnp.bfloat16)
    b1 = jnp.zeros((1, hid), jnp.float32)
    b2 = jnp.zeros((1, embed_dim), jnp.float32)
    gamma = jnp.ones((1, embed_dim), jnp.float32)
    beta = jnp.zeros((1, embed_dim), jnp.float32)
    return w1, b1, w2, b2, gamma, beta


def ffn_ref(x, w1, b1, w2, b2, gamma, beta):
    """Plain-JAX reference matching the kernel's numerics (bf16 MXU inputs, f32 acc)."""
    mean = jnp.mean(x, axis=-1, keepdims=True)
    var = jnp.mean((x - mean) ** 2, axis=-1, keepdims=True)
    xn = (x - mean) * jax.lax.rsqrt(var + 1e-5) * gamma[0] + beta[0]
    h = jnp.maximum(
        jnp.dot(xn.astype(jnp.bfloat16), w1,
                preferred_element_type=jnp.float32) + b1[0], 0.0)
    y = jnp.dot(h.astype(jnp.bfloat16), w2,
                preferred_element_type=jnp.float32) + b2[0]
    return x + y


if __name__ == "__main__":
    key = jax.random.PRNGKey(0)
    kx, kp = jax.random.split(key)

    seq, bsz, embed_dim = 8, 2, 32            # small shapes; hidden = 4*embed = 128
    x = jax.random.normal(kx, (seq, bsz, embed_dim), jnp.float32)
    params = init_params(kp, embed_dim)

    out = jax.block_until_ready(ffn_pallas(x, *params))

    ref = ffn_ref(x, *params)
    assert out.shape == x.shape
    assert jnp.allclose(out, ref, atol=2e-2, rtol=2e-2), "mismatch vs reference"

    print("KERNEL_OK")
</pallas_src>

<mosaic_0001>
module attributes {stable_mosaic.version = 11 : i64} {
  func.func @ffn_kernel(%arg0: i32, %arg1: i32, %arg2: memref<256x32xf32, #tpu.memory_space<vmem>>, %arg3: memref<32x128xbf16, #tpu.memory_space<vmem>>, %arg4: memref<1x128xf32, #tpu.memory_space<vmem>>, %arg5: memref<128x32xbf16, #tpu.memory_space<vmem>>, %arg6: memref<1x32xf32, #tpu.memory_space<vmem>>, %arg7: memref<1x32xf32, #tpu.memory_space<vmem>>, %arg8: memref<1x32xf32, #tpu.memory_space<vmem>>, %arg9: memref<256x32xf32, #tpu.memory_space<vmem>>, %arg10: memref<256x32xbf16, #tpu.memory_space<vmem>>, %arg11: memref<256x32xf32, #tpu.memory_space<vmem>>) attributes {dimension_semantics = [#tpu.dimension_semantics<parallel>, #tpu.dimension_semantics<arbitrary>], iteration_bounds = array<i64: 1, 1>, scalar_prefetch = 0 : i64, scratch_operands = 2 : i64, tpu.core_type = #tpu.core_type<tc>, window_params = [{transform_indices = @transform_0, window_bounds = array<i64: 256, 32>}, {transform_indices = @transform_1, window_bounds = array<i64: 32, 128>}, {transform_indices = @transform_2, window_bounds = array<i64: 1, 128>}, {transform_indices = @transform_3, window_bounds = array<i64: 128, 32>}, {pipeline_mode = #tpu.pipeline_mode<synchronous>, transform_indices = @transform_4, window_bounds = array<i64: 1, 32>}, {pipeline_mode = #tpu.pipeline_mode<synchronous>, transform_indices = @transform_5, window_bounds = array<i64: 1, 32>}, {pipeline_mode = #tpu.pipeline_mode<synchronous>, transform_indices = @transform_6, window_bounds = array<i64: 1, 32>}, {transform_indices = @transform_7, window_bounds = array<i64: 256, 32>}]} {
    %c0_i32 = arith.constant 0 : i32
    %0 = arith.cmpi eq, %arg1, %c0_i32 : i32
    %1 = arith.extui %0 : i1 to i32
    %c0_i32_0 = arith.constant 0 : i32
    %2 = arith.cmpi ne, %1, %c0_i32_0 : i32
    scf.if %2 {
      %c0_16 = arith.constant 0 : index
      %c0_17 = arith.constant 0 : index
      %20 = vector.load %arg2[%c0_16, %c0_17] : memref<256x32xf32, #tpu.memory_space<vmem>>, vector<256x32xf32>
      %cst_18 = arith.constant dense<0.000000e+00> : vector<256xf32>
      %21 = vector.multi_reduction <add>, %20, %cst_18 [1] : vector<256x32xf32> to vector<256xf32>
      %22 = vector.shape_cast %21 : vector<256xf32> to vector<256x1xf32>
      %cst_19 = arith.constant 3.200000e+01 : f32
      %23 = vector.broadcast %cst_19 : f32 to vector<256x1xf32>
      %24 = arith.divf %22, %23 : vector<256x1xf32>
      %25 = vector.broadcast %24 : vector<256x1xf32> to vector<256x32xf32>
      %26 = arith.subf %20, %25 : vector<256x32xf32>
      %27 = arith.mulf %26, %26 : vector<256x32xf32>
      %cst_20 = arith.constant dense<0.000000e+00> : vector<256xf32>
      %28 = vector.multi_reduction <add>, %27, %cst_20 [1] : vector<256x32xf32> to vector<256xf32>
      %29 = vector.shape_cast %28 : vector<256xf32> to vector<256x1xf32>
      %cst_21 = arith.constant 3.200000e+01 : f32
      %30 = vector.broadcast %cst_21 : f32 to vector<256x1xf32>
      %31 = arith.divf %29, %30 : vector<256x1xf32>
      %cst_22 = arith.constant 9.99999974E-6 : f32
      %32 = vector.broadcast %cst_22 : f32 to vector<256x1xf32>
      %33 = arith.addf %31, %32 : vector<256x1xf32>
      %34 = math.rsqrt %33 : vector<256x1xf32>
      %35 = vector.broadcast %34 : vector<256x1xf32> to vector<256x32xf32>
      %36 = arith.mulf %26, %35 : vector<256x32xf32>
      %c0_23 = arith.constant 0 : index
      %c0_24 = arith.constant 0 : index
      %37 = vector.load %arg7[%c0_23, %c0_24] : memref<1x32xf32, #tpu.memory_space<vmem>>, vector<1x32xf32>
      %38 = vector.broadcast %37 : vector<1x32xf32> to vector<256x32xf32>
      %39 = arith.mulf %36, %38 : vector<256x32xf32>
      %c0_25 = arith.constant 0 : index
      %c0_26 = arith.constant 0 : index
      %40 = vector.load %arg8[%c0_25, %c0_26] : memref<1x32xf32, #tpu.memory_space<vmem>>, vector<1x32xf32>
      %41 = vector.broadcast %40 : vector<1x32xf32> to vector<256x32xf32>
      %42 = arith.addf %39, %41 : vector<256x32xf32>
      %43 = arith.truncf %42 : vector<256x32xf32> to vector<256x32xbf16>
      %c0_27 = arith.constant 0 : index
      %c0_28 = arith.constant 0 : index
      %44 = vector.load %arg10[%c0_27, %c0_28] : memref<256x32xbf16, #tpu.memory_space<vmem>>, vector<256x32xbf16>
      tpu.vector_store %arg10[%c0_27, %c0_28], %43 {strides = array<i32>} : memref<256x32xbf16, #tpu.memory_space<vmem>>, vector<256x32xbf16>,
      %cst_29 = arith.constant 0.000000e+00 : f32
      %45 = vector.broadcast %cst_29 : f32 to vector<256x32xf32>
      %c0_30 = arith.constant 0 : index
      %c0_31 = arith.constant 0 : index
      %46 = vector.load %arg11[%c0_30, %c0_31] : memref<256x32xf32, #tpu.memory_space<vmem>>, vector<256x32xf32>
      tpu.vector_store %arg11[%c0_30, %c0_31], %45 {strides = array<i32>} : memref<256x32xf32, #tpu.memory_space<vmem>>, vector<256x32xf32>,
    } else {
    }
    %c0 = arith.constant 0 : index
    %c0_1 = arith.constant 0 : index
    %3 = vector.load %arg10[%c0, %c0_1] : memref<256x32xbf16, #tpu.memory_space<vmem>>, vector<256x32xbf16>
    %c0_2 = arith.constant 0 : index
    %c0_3 = arith.constant 0 : index
    %4 = vector.load %arg3[%c0_2, %c0_3] : memref<32x128xbf16, #tpu.memory_space<vmem>>, vector<32x128xbf16>
    %cst = arith.constant dense<0.000000e+00> : vector<256x128xf32>
    %5 = tpu.matmul %3, %4, %cst {dimension_numbers = #tpu.dot_dimension_numbers<[1], [0], [0], [1], [0, 0, 1, 1], [], []>} : vector<256x32xbf16>, vector<32x128xbf16>, vector<256x128xf32> -> vector<256x128xf32>
    %c0_4 = arith.constant 0 : index
    %c0_5 = arith.constant 0 : index
    %6 = vector.load %arg4[%c0_4, %c0_5] : memref<1x128xf32, #tpu.memory_space<vmem>>, vector<1x128xf32>
    %7 = vector.broadcast %6 : vector<1x128xf32> to vector<256x128xf32>
    %8 = arith.addf %5, %7 : vector<256x128xf32>
    %cst_6 = arith.constant 0.000000e+00 : f32
    %9 = vector.broadcast %cst_6 : f32 to vector<256x128xf32>
    %10 = arith.maximumf %8, %9 : vector<256x128xf32>
    %c0_7 = arith.constant 0 : index
    %c0_8 = arith.constant 0 : index
    %11 = vector.load %arg11[%c0_7, %c0_8] : memref<256x32xf32, #tpu.memory_space<vmem>>, vector<256x32xf32>
    %12 = arith.truncf %10 : vector<256x128xf32> to vector<256x128xbf16>
    %c0_9 = arith.constant 0 : index
    %c0_10 = arith.constant 0 : index
    %13 = vector.load %arg5[%c0_9, %c0_10] : memref<128x32xbf16, #tpu.memory_space<vmem>>, vector<128x32xbf16>
    %cst_11 = arith.constant dense<0.000000e+00> : vector<256x32xf32>
    %14 = tpu.matmul %12, %13, %cst_11 {dimension_numbers = #tpu.dot_dimension_numbers<[1], [0], [0], [1], [0, 0, 1, 1], [], []>} : vector<256x128xbf16>, vector<128x32xbf16>, vector<256x32xf32> -> vector<256x32xf32>
    %15 = arith.addf %11, %14 : vector<256x32xf32>
    %c0_12 = arith.constant 0 : index
    %c0_13 = arith.constant 0 : index
    %16 = vector.load %arg11[%c0_12, %c0_13] : memref<256x32xf32, #tpu.memory_space<vmem>>, vector<256x32xf32>
    tpu.vector_store %arg11[%c0_12, %c0_13], %15 {strides = array<i32>} : memref<256x32xf32, #tpu.memory_space<vmem>>, vector<256x32xf32>,
    %c0_i32_14 = arith.constant 0 : i32
    %17 = arith.cmpi eq, %arg1, %c0_i32_14 : i32
    %18 = arith.extui %17 : i1 to i32
    %c0_i32_15 = arith.constant 0 : i32
    %19 = arith.cmpi ne, %18, %c0_i32_15 : i32
    scf.if %19 {
      %c0_16 = arith.constant 0 : index
      %c0_17 = arith.constant 0 : index
      %20 = vector.load %arg2[%c0_16, %c0_17] : memref<256x32xf32, #tpu.memory_space<vmem>>, vector<256x32xf32>
      %c0_18 = arith.constant 0 : index
      %c0_19 = arith.constant 0 : index
      %21 = vector.load %arg11[%c0_18, %c0_19] : memref<256x32xf32, #tpu.memory_space<vmem>>, vector<256x32xf32>
      %22 = arith.addf %20, %21 : vector<256x32xf32>
      %c0_20 = arith.constant 0 : index
      %c0_21 = arith.constant 0 : index
      %23 = vector.load %arg6[%c0_20, %c0_21] : memref<1x32xf32, #tpu.memory_space<vmem>>, vector<1x32xf32>
      %24 = vector.broadcast %23 : vector<1x32xf32> to vector<256x32xf32>
      %25 = arith.addf %22, %24 : vector<256x32xf32>
      %c0_22 = arith.constant 0 : index
      %c0_23 = arith.constant 0 : index
      %26 = vector.load %arg9[%c0_22, %c0_23] : memref<256x32xf32, #tpu.memory_space<vmem>>, vector<256x32xf32>
      tpu.vector_store %arg9[%c0_22, %c0_23], %25 {strides = array<i32>} : memref<256x32xf32, #tpu.memory_space<vmem>>, vector<256x32xf32>,
    } else {
    }
    return
  }
  func.func @transform_0(%arg0: i32, %arg1: i32) -> (i32, i32) {
    %c0_i32 = arith.constant 0 : i32
    %c0_i32_0 = arith.constant 0 : i32
    return %arg0, %c0_i32 : i32, i32
  }
  func.func @transform_1(%arg0: i32, %arg1: i32) -> (i32, i32) {
    %c0_i32 = arith.constant 0 : i32
    %c0_i32_0 = arith.constant 0 : i32
    return %c0_i32, %arg1 : i32, i32
  }
  func.func @transform_2(%arg0: i32, %arg1: i32) -> (i32, i32) {
    %c0_i32 = arith.constant 0 : i32
    %c0_i32_0 = arith.constant 0 : i32
    return %c0_i32, %arg1 : i32, i32
  }
  func.func @transform_3(%arg0: i32, %arg1: i32) -> (i32, i32) {
    %c0_i32 = arith.constant 0 : i32
    %c0_i32_0 = arith.constant 0 : i32
    return %arg1, %c0_i32 : i32, i32
  }
  func.func @transform_4(%arg0: i32, %arg1: i32) -> (i32, i32) {
    %c0_i32 = arith.constant 0 : i32
    %c0_i32_0 = arith.constant 0 : i32
    %c0_i32_1 = arith.constant 0 : i32
    return %c0_i32, %c0_i32_0 : i32, i32
  }
  func.func @transform_5(%arg0: i32, %arg1: i32) -> (i32, i32) {
    %c0_i32 = arith.constant 0 : i32
    %c0_i32_0 = arith.constant 0 : i32
    %c0_i32_1 = arith.constant 0 : i32
    return %c0_i32, %c0_i32_0 : i32, i32
  }
  func.func @transform_6(%arg0: i32, %arg1: i32) -> (i32, i32) {
    %c0_i32 = arith.constant 0 : i32
    %c0_i32_0 = arith.constant 0 : i32
    %c0_i32_1 = arith.constant 0 : i32
    return %c0_i32, %c0_i32_0 : i32, i32
  }
  func.func @transform_7(%arg0: i32, %arg1: i32) -> (i32, i32) {
    %c0_i32 = arith.constant 0 : i32
    %c0_i32_0 = arith.constant 0 : i32
    return %arg0, %c0_i32 : i32, i32
  }
}

</mosaic_0001>

<llo_original>
// kernel: tpu_custom_call.1
$region0: #{tpu_custom_call.1}
  #allocation0 [shape = 'u32[]', space=smem, size = 0x4, offset = 0x4, fixed_abs, tag = 'smem constant byte address 0x4 - core index']
  #allocation1 [shape = 'u32[144,128]{1,0:T(1,128)}', space=vmem, size = 0x12000, scoped, tag = 'internal scratch']
  #allocation2 [shape = 'bf16[256,32]{1,0:T(16,128)(2,1)}', space=vmem, size = 0x10000, scoped, tag = 'scratch operand']
  #allocation3 [shape = 'f32[256,32]{1,0:T(8,128)}', space=vmem, size = 0x20000, scoped, tag = 'scratch operand']
  %s0 = inlined_call_operand.vmem [shape: f32[256,32], index: 0, kind: input, shape index: {}]
  %s1 = inlined_call_operand.vmem [shape: bf16[32,128], index: 1, kind: input, shape index: {}]
  %s2 = inlined_call_operand.vmem [shape: f32[1,128], index: 2, kind: input, shape index: {}]
  %s3 = inlined_call_operand.vmem [shape: bf16[128,32], index: 3, kind: input, shape index: {}]
  %s4 = inlined_call_operand.vmem [shape: f32[1,32], index: 4, kind: input, shape index: {}]
  %s5 = inlined_call_operand.vmem [shape: f32[1,32], index: 5, kind: input, shape index: {}]
  %s6 = inlined_call_operand.vmem [shape: f32[1,32], index: 6, kind: input, shape index: {}]
  %s7 = inlined_call_operand.vmem [shape: f32[256,32], index: 7, kind: output, shape index: {}]
  %s8 = sld [smem:[#allocation0]]
  $region46: #{tpu_custom_call.1} parent=0
    _
  %s10 = ssub.s32 1, %s8
  %s11 = scalar_select 0, %s10, %s8
  // Predicated region
  $region2: #{tpu_custom_call.1} parent=0 // pred_check
    _
  $region3: #{tpu_custom_call.1} parent=0 // pred_check_branch
    %13 = sbr.rel (0) target = $region5
  $region4: #{tpu_custom_call.1} parent=0 // pred_region
    _
  $region5: #{tpu_custom_call.1} parent=0 // pred_fallthru
    _
  // Predicated region
  $region6: #{tpu_custom_call.1} parent=0 // pred_check
    _
  $region7: #{tpu_custom_call.1} parent=0 // pred_check_branch
    %15 = sbr.rel (0) target = $region9
  $region8: #{tpu_custom_call.1} parent=0 // pred_region
    _
  $region9: #{tpu_custom_call.1} parent=0 // pred_fallthru
    _
  // Predicated region
  $region10: #{tpu_custom_call.1} parent=0 // pred_check
    _
  $region11: #{tpu_custom_call.1} parent=0 // pred_check_branch
    %17 = sbr.rel (0) target = $region13
  $region12: #{tpu_custom_call.1} parent=0 // pred_region
    _
  $region13: #{tpu_custom_call.1} parent=0 // pred_fallthru
    _
  // Predicated region
  $region14: #{tpu_custom_call.1} parent=0 // pred_check
    _
  $region15: #{tpu_custom_call.1} parent=0 // pred_check_branch
    %19 = sbr.rel (0) target = $region17
  $region16: #{tpu_custom_call.1} parent=0 // pred_region
    _
  $region17: #{tpu_custom_call.1} parent=0 // pred_fallthru
    _
  // Predicated region
  $region18: #{tpu_custom_call.1} parent=0 // pred_check
    _
  $region19: #{tpu_custom_call.1} parent=0 // pred_check_branch
    %21 = sbr.rel (0) target = $region21
  $region20: #{tpu_custom_call.1} parent=0 // pred_region
    _
  $region21: #{tpu_custom_call.1} parent=0 // pred_fallthru
    _
  // Predicated region
  $region22: #{tpu_custom_call.1} parent=0 // pred_check
    _
  $region23: #{tpu_custom_call.1} parent=0 // pred_check_branch
    %23 = sbr.rel (0) target = $region25
  $region24: #{tpu_custom_call.1} parent=0 // pred_region
    _
  $region25: #{tpu_custom_call.1} parent=0 // pred_fallthru
    _
  // Predicated region
  $region26: #{tpu_custom_call.1} parent=0 // pred_check
    _
  $region27: #{tpu_custom_call.1} parent=0 // pred_check_branch
    %25 = sbr.rel (0) target = $region29
  $region28: #{tpu_custom_call.1} parent=0 // pred_region
    _
  $region29: #{tpu_custom_call.1} parent=0 // pred_fallthru
    _
  %p27 = scmp.eq.s32.totalorder 0, 0
  // Predicated region
  $region30: #{tpu_custom_call.1} parent=0 // pred_check
    %p28 = pneg %p27
  $region31: #{tpu_custom_call.1} parent=0 // pred_check_branch
    %30 = sbr.rel (%p28) target = $region33
  $region32: #{tpu_custom_call.1} parent=0 // pred_region
    %v31 = vld [vmem:[%s0] sm:$0xff]
    %v32 = vld [vmem:[%s0 + $0x8] sm:$0xff]
    %v33 = vld [vmem:[%s0 + $0x10] sm:$0xff]
    %v34 = vld [vmem:[%s0 + $0x18] sm:$0xff]
    %v35 = vld [vmem:[%s0 + $0x20] sm:$0xff]
    %v36 = vld [vmem:[%s0 + $0x28] sm:$0xff]
    %v37 = vld [vmem:[%s0 + $0x30] sm:$0xff]
    %v38 = vld [vmem:[%s0 + $0x38] sm:$0xff]
    %v39 = vld [vmem:[%s0 + $0x40] sm:$0xff]
    %v40 = vld [vmem:[%s0 + $0x48] sm:$0xff]
    %v41 = vld [vmem:[%s0 + $0x50] sm:$0xff]
    %v42 = vld [vmem:[%s0 + $0x58] sm:$0xff]
    %v43 = vld [vmem:[%s0 + $0x60] sm:$0xff]
    %v44 = vld [vmem:[%s0 + $0x68] sm:$0xff]
    %v45 = vld [vmem:[%s0 + $0x70] sm:$0xff]
    %v46 = vld [vmem:[%s0 + $0x78] sm:$0xff]
    %v47 = vld [vmem:[%s0 + $0x80] sm:$0xff]
    %v48 = vld [vmem:[%s0 + $0x88] sm:$0xff]
    %v49 = vld [vmem:[%s0 + $0x90] sm:$0xff]
    %v50 = vld [vmem:[%s0 + $0x98] sm:$0xff]
    %v51 = vld [vmem:[%s0 + $0xa0] sm:$0xff]
    %v52 = vld [vmem:[%s0 + $0xa8] sm:$0xff]
    %v53 = vld [vmem:[%s0 + $0xb0] sm:$0xff]
    %v54 = vld [vmem:[%s0 + $0xb8] sm:$0xff]
    %v55 = vld [vmem:[%s0 + $0xc0] sm:$0xff]
    %v56 = vld [vmem:[%s0 + $0xc8] sm:$0xff]
    %v57 = vld [vmem:[%s0 + $0xd0] sm:$0xff]
    %v58 = vld [vmem:[%s0 + $0xd8] sm:$0xff]
    %v59 = vld [vmem:[%s0 + $0xe0] sm:$0xff]
    %v60 = vld [vmem:[%s0 + $0xe8] sm:$0xff]
    %v61 = vld [vmem:[%s0 + $0xf0] sm:$0xff]
    %v62 = vld [vmem:[%s0 + $0xf8] sm:$0xff]
    %vm63 = vcmask 261120
    %v64 = vsel %vm63, %v31, 0.0
    %65 = vadd.xlane.f32.xlu0 %v64
    %v66 = vpop.xlane.xlu0 %65
    %v67 = vsel %vm63, %v32, 0.0
    %68 = vadd.xlane.f32.xlu0 %v67
    %v69 = vpop.xlane.xlu0 %68
    %v70 = vsel %vm63, %v33, 0.0
    %71 = vadd.xlane.f32.xlu0 %v70
    %v72 = vpop.xlane.xlu0 %71
    %v73 = vsel %vm63, %v34, 0.0
    %74 = vadd.xlane.f32.xlu0 %v73
    %v75 = vpop.xlane.xlu0 %74
    %v76 = vsel %vm63, %v35, 0.0
    %77 = vadd.xlane.f32.xlu0 %v76
    %v78 = vpop.xlane.xlu0 %77
    %v79 = vsel %vm63, %v36, 0.0
    %80 = vadd.xlane.f32.xlu0 %v79
    %v81 = vpop.xlane.xlu0 %80
    %v82 = vsel %vm63, %v37, 0.0
    %83 = vadd.xlane.f32.xlu0 %v82
    %v84 = vpop.xlane.xlu0 %83
    %v85 = vsel %vm63, %v38, 0.0
    %86 = vadd.xlane.f32.xlu0 %v85
    %v87 = vpop.xlane.xlu0 %86
    %v88 = vsel %vm63, %v39, 0.0
    %89 = vadd.xlane.f32.xlu0 %v88
    %v90 = vpop.xlane.xlu0 %89
    %v91 = vsel %vm63, %v40, 0.0
    %92 = vadd.xlane.f32.xlu0 %v91
    %v93 = vpop.xlane.xlu0 %92
    %v94 = vsel %vm63, %v41, 0.0
    %95 = vadd.xlane.f32.xlu0 %v94
    %v96 = vpop.xlane.xlu0 %95
    %v97 = vsel %vm63, %v42, 0.0
    %98 = vadd.xlane.f32.xlu0 %v97
    %v99 = vpop.xlane.xlu0 %98
    %v100 = vsel %vm63, %v43, 0.0
    %101 = vadd.xlane.f32.xlu0 %v100
    %v102 = vpop.xlane.xlu0 %101
    %v103 = vsel %vm63, %v44, 0.0
    %104 = vadd.xlane.f32.xlu0 %v103
    %v105 = vpop.xlane.xlu0 %104
    %v106 = vsel %vm63, %v45, 0.0
    %107 = vadd.xlane.f32.xlu0 %v106
    %v108 = vpop.xlane.xlu0 %107
    %v109 = vsel %vm63, %v46, 0.0
    %110 = vadd.xlane.f32.xlu0 %v109
    %v111 = vpop.xlane.xlu0 %110
    %v112 = vsel %vm63, %v47, 0.0
    %113 = vadd.xlane.f32.xlu0 %v112
    %v114 = vpop.xlane.xlu0 %113
    %v115 = vsel %vm63, %v48, 0.0
    %116 = vadd.xlane.f32.xlu0 %v115
    %v117 = vpop.xlane.xlu0 %116
    %v118 = vsel %vm63, %v49, 0.0
    %119 = vadd.xlane.f32.xlu0 %v118
    %v120 = vpop.xlane.xlu0 %119
    %v121 = vsel %vm63, %v50, 0.0
    %122 = vadd.xlane.f32.xlu0 %v121
    %v123 = vpop.xlane.xlu0 %122
    %v124 = vsel %vm63, %v51, 0.0
    %125 = vadd.xlane.f32.xlu0 %v124
    %v126 = vpop.xlane.xlu0 %125
    %v127 = vsel %vm63, %v52, 0.0
    %128 = vadd.xlane.f32.xlu0 %v127
    %v129 = vpop.xlane.xlu0 %128
    %v130 = vsel %vm63, %v53, 0.0
    %131 = vadd.xlane.f32.xlu0 %v130
    %v132 = vpop.xlane.xlu0 %131
    %v133 = vsel %vm63, %v54, 0.0
    %134 = vadd.xlane.f32.xlu0 %v133
    %v135 = vpop.xlane.xlu0 %134
    %v136 = vsel %vm63, %v55, 0.0
    %137 = vadd.xlane.f32.xlu0 %v136
    %v138 = vpop.xlane.xlu0 %137
    %v139 = vsel %vm63, %v56, 0.0
    %140 = vadd.xlane.f32.xlu0 %v139
    %v141 = vpop.xlane.xlu0 %140
    %v142 = vsel %vm63, %v57, 0.0
    %143 = vadd.xlane.f32.xlu0 %v142
    %v144 = vpop.xlane.xlu0 %143
    %v145 = vsel %vm63, %v58, 0.0
    %146 = vadd.xlane.f32.xlu0 %v145
    %v147 = vpop.xlane.xlu0 %146
    %v148 = vsel %vm63, %v59, 0.0
    %149 = vadd.xlane.f32.xlu0 %v148
    %v150 = vpop.xlane.xlu0 %149
    %v151 = vsel %vm63, %v60, 0.0
    %152 = vadd.xlane.f32.xlu0 %v151
    %v153 = vpop.xlane.xlu0 %152
    %v154 = vsel %vm63, %v61, 0.0
    %155 = vadd.xlane.f32.xlu0 %v154
    %v156 = vpop.xlane.xlu0 %155
    %v157 = vsel %vm63, %v62, 0.0
    %158 = vadd.xlane.f32.xlu0 %v157
    %v159 = vpop.xlane.xlu0 %158
    %v160 = vrcp.pop 32.0
    %v161 = vmul.f32 %v66, %v160
    %v162 = vmul.f32 %v69, %v160
    %v163 = vmul.f32 %v72, %v160
    %v164 = vmul.f32 %v75, %v160
    %v165 = vmul.f32 %v78, %v160
    %v166 = vmul.f32 %v81, %v160
    %v167 = vmul.f32 %v84, %v160
    %v168 = vmul.f32 %v87, %v160
    %v169 = vmul.f32 %v90, %v160
    %v170 = vmul.f32 %v93, %v160
    %v171 = vmul.f32 %v96, %v160
    %v172 = vmul.f32 %v99, %v160
    %v173 = vmul.f32 %v102, %v160
    %v174 = vmul.f32 %v105, %v160
    %v175 = vmul.f32 %v108, %v160
    %v176 = vmul.f32 %v111, %v160
    %v177 = vmul.f32 %v114, %v160
    %v178 = vmul.f32 %v117, %v160
    %v179 = vmul.f32 %v120, %v160
    %v180 = vmul.f32 %v123, %v160
    %v181 = vmul.f32 %v126, %v160
    %v182 = vmul.f32 %v129, %v160
    %v183 = vmul.f32 %v132, %v160
    %v184 = vmul.f32 %v135, %v160
    %v185 = vmul.f32 %v138, %v160
    %v186 = vmul.f32 %v141, %v160
    %v187 = vmul.f32 %v144, %v160
    %v188 = vmul.f32 %v147, %v160
    %v189 = vmul.f32 %v150, %v160
    %v190 = vmul.f32 %v153, %v160
    %v191 = vmul.f32 %v156, %v160
    %v192 = vmul.f32 %v159, %v160
    %v193 = vsub.f32 %v31, %v161
    %v194 = vsub.f32 %v32, %v162
    %v195 = vsub.f32 %v33, %v163
    %v196 = vsub.f32 %v34, %v164
    %v197 = vsub.f32 %v35, %v165
    %v198 = vsub.f32 %v36, %v166
    %v199 = vsub.f32 %v37, %v167
    %v200 = vsub.f32 %v38, %v168
    %v201 = vsub.f32 %v39, %v169
    %v202 = vsub.f32 %v40, %v170
    %v203 = vsub.f32 %v41, %v171
    %v204 = vsub.f32 %v42, %v172
    %v205 = vsub.f32 %v43, %v173
    %v206 = vsub.f32 %v44, %v174
    %v207 = vsub.f32 %v45, %v175
    %v208 = vsub.f32 %v46, %v176
    %v209 = vsub.f32 %v47, %v177
    %v210 = vsub.f32 %v48, %v178
    %v211 = vsub.f32 %v49, %v179
    %v212 = vsub.f32 %v50, %v180
    %v213 = vsub.f32 %v51, %v181
    %v214 = vsub.f32 %v52, %v182
    %v215 = vsub.f32 %v53, %v183
    %v216 = vsub.f32 %v54, %v184
    %v217 = vsub.f32 %v55, %v185
    %v218 = vsub.f32 %v56, %v186
    %v219 = vsub.f32 %v57, %v187
    %v220 = vsub.f32 %v58, %v188
    %v221 = vsub.f32 %v59, %v189
    %v222 = vsub.f32 %v60, %v190
    %v223 = vsub.f32 %v61, %v191
    %v224 = vsub.f32 %v62, %v192
    %v225 = vmul.f32 %v193, %v193
    %v226 = vmul.f32 %v194, %v194
    %v227 = vmul.f32 %v195, %v195
    %v228 = vmul.f32 %v196, %v196
    %v229 = vmul.f32 %v197, %v197
    %v230 = vmul.f32 %v198, %v198
    %v231 = vmul.f32 %v199, %v199
    %v232 = vmul.f32 %v200, %v200
    %v233 = vmul.f32 %v201, %v201
    %v234 = vmul.f32 %v202, %v202
    %v235 = vmul.f32 %v203, %v203
    %v236 = vmul.f32 %v204, %v204
    %v237 = vmul.f32 %v205, %v205
    %v238 = vmul.f32 %v206, %v206
    %v239 = vmul.f32 %v207, %v207
    %v240 = vmul.f32 %v208, %v208
    %v241 = vmul.f32 %v209, %v209
    %v242 = vmul.f32 %v210, %v210
    %v243 = vmul.f32 %v211, %v211
    %v244 = vmul.f32 %v212, %v212
    %v245 = vmul.f32 %v213, %v213
    %v246 = vmul.f32 %v214, %v214
    %v247 = vmul.f32 %v215, %v215
    %v248 = vmul.f32 %v216, %v216
    %v249 = vmul.f32 %v217, %v217
    %v250 = vmul.f32 %v218, %v218
    %v251 = vmul.f32 %v219, %v219
    %v252 = vmul.f32 %v220, %v220
    %v253 = vmul.f32 %v221, %v221
    %v254 = vmul.f32 %v222, %v222
    %v255 = vmul.f32 %v223, %v223
    %v256 = vmul.f32 %v224, %v224
    %v257 = vsel %vm63, %v225, 0.0
    %258 = vadd.xlane.f32.xlu0 %v257
    %v259 = vpop.xlane.xlu0 %258
    %v260 = vsel %vm63, %v226, 0.0
    %261 = vadd.xlane.f32.xlu0 %v260
    %v262 = vpop.xlane.xlu0 %261
    %v263 = vsel %vm63, %v227, 0.0
    %264 = vadd.xlane.f32.xlu0 %v263
    %v265 = vpop.xlane.xlu0 %264
    %v266 = vsel %vm63, %v228, 0.0
    %267 = vadd.xlane.f32.xlu0 %v266
    %v268 = vpop.xlane.xlu0 %267
    %v269 = vsel %vm63, %v229, 0.0
    %270 = vadd.xlane.f32.xlu0 %v269
    %v271 = vpop.xlane.xlu0 %270
    %v272 = vsel %vm63, %v230, 0.0
    %273 = vadd.xlane.f32.xlu0 %v272
    %v274 = vpop.xlane.xlu0 %273
    %v275 = vsel %vm63, %v231, 0.0
    %276 = vadd.xlane.f32.xlu0 %v275
    %v277 = vpop.xlane.xlu0 %276
    %v278 = vsel %vm63, %v232, 0.0
    %279 = vadd.xlane.f32.xlu0 %v278
    %v280 = vpop.xlane.xlu0 %279
    %v281 = vsel %vm63, %v233, 0.0
    %282 = vadd.xlane.f32.xlu0 %v281
    %v283 = vpop.xlane.xlu0 %282
    %v284 = vsel %vm63, %v234, 0.0
    %285 = vadd.xlane.f32.xlu0 %v284
    %v286 = vpop.xlane.xlu0 %285
    %v287 = vsel %vm63, %v235, 0.0
    %288 = vadd.xlane.f32.xlu0 %v287
    %v289 = vpop.xlane.xlu0 %288
    %v290 = vsel %vm63, %v236, 0.0
    %291 = vadd.xlane.f32.xlu0 %v290
    %v292 = vpop.xlane.xlu0 %291
    %v293 = vsel %vm63, %v237, 0.0
    %294 = vadd.xlane.f32.xlu0 %v293
    %v295 = vpop.xlane.xlu0 %294
    %v296 = vsel %vm63, %v238, 0.0
    %297 = vadd.xlane.f32.xlu0 %v296
    %v298 = vpop.xlane.xlu0 %297
    %v299 = vsel %vm63, %v239, 0.0
    %300 = vadd.xlane.f32.xlu0 %v299
    %v301 = vpop.xlane.xlu0 %300
    %v302 = vsel %vm63, %v240, 0.0
    %303 = vadd.xlane.f32.xlu0 %v302
    %v304 = vpop.xlane.xlu0 %303
    %v305 = vsel %vm63, %v241, 0.0
    %306 = vadd.xlane.f32.xlu0 %v305
    %v307 = vpop.xlane.xlu0 %306
    %v308 = vsel %vm63, %v242, 0.0
    %309 = vadd.xlane.f32.xlu0 %v308
    %v310 = vpop.xlane.xlu0 %309
    %v311 = vsel %vm63, %v243, 0.0
    %312 = vadd.xlane.f32.xlu0 %v311
    %v313 = vpop.xlane.xlu0 %312
    %v314 = vsel %vm63, %v244, 0.0
    %315 = vadd.xlane.f32.xlu0 %v314
    %v316 = vpop.xlane.xlu0 %315
    %v317 = vsel %vm63, %v245, 0.0
    %318 = vadd.xlane.f32.xlu0 %v317
    %v319 = vpop.xlane.xlu0 %318
    %v320 = vsel %vm63, %v246, 0.0
    %321 = vadd.xlane.f32.xlu0 %v320
    %v322 = vpop.xlane.xlu0 %321
    %v323 = vsel %vm63, %v247, 0.0
    %324 = vadd.xlane.f32.xlu0 %v323
    %v325 = vpop.xlane.xlu0 %324
    %v326 = vsel %vm63, %v248, 0.0
    %327 = vadd.xlane.f32.xlu0 %v326
    %v328 = vpop.xlane.xlu0 %327
    %v329 = vsel %vm63, %v249, 0.0
    %330 = vadd.xlane.f32.xlu0 %v329
    %v331 = vpop.xlane.xlu0 %330
    %v332 = vsel %vm63, %v250, 0.0
    %333 = vadd.xlane.f32.xlu0 %v332
    %v334 = vpop.xlane.xlu0 %333
    %v335 = vsel %vm63, %v251, 0.0
    %336 = vadd.xlane.f32.xlu0 %v335
    %v337 = vpop.xlane.xlu0 %336
    %v338 = vsel %vm63, %v252, 0.0
    %339 = vadd.xlane.f32.xlu0 %v338
    %v340 = vpop.xlane.xlu0 %339
    %v341 = vsel %vm63, %v253, 0.0
    %342 = vadd.xlane.f32.xlu0 %v341
    %v343 = vpop.xlane.xlu0 %342
    %v344 = vsel %vm63, %v254, 0.0
    %345 = vadd.xlane.f32.xlu0 %v344
    %v346 = vpop.xlane.xlu0 %345
    %v347 = vsel %vm63, %v255, 0.0
    %348 = vadd.xlane.f32.xlu0 %v347
    %v349 = vpop.xlane.xlu0 %348
    %v350 = vsel %vm63, %v256, 0.0
    %351 = vadd.xlane.f32.xlu0 %v350
    %v352 = vpop.xlane.xlu0 %351
    %v353 = vmul.f32 %v259, %v160
    %v354 = vmul.f32 %v262, %v160
    %v355 = vmul.f32 %v265, %v160
    %v356 = vmul.f32 %v268, %v160
    %v357 = vmul.f32 %v271, %v160
    %v358 = vmul.f32 %v274, %v160
    %v359 = vmul.f32 %v277, %v160
    %v360 = vmul.f32 %v280, %v160
    %v361 = vmul.f32 %v283, %v160
    %v362 = vmul.f32 %v286, %v160
    %v363 = vmul.f32 %v289, %v160
    %v364 = vmul.f32 %v292, %v160
    %v365 = vmul.f32 %v295, %v160
    %v366 = vmul.f32 %v298, %v160
    %v367 = vmul.f32 %v301, %v160
    %v368 = vmul.f32 %v304, %v160
    %v369 = vmul.f32 %v307, %v160
    %v370 = vmul.f32 %v310, %v160
    %v371 = vmul.f32 %v313, %v160
    %v372 = vmul.f32 %v316, %v160
    %v373 = vmul.f32 %v319, %v160
    %v374 = vmul.f32 %v322, %v160
    %v375 = vmul.f32 %v325, %v160
    %v376 = vmul.f32 %v328, %v160
    %v377 = vmul.f32 %v331, %v160
    %v378 = vmul.f32 %v334, %v160
    %v379 = vmul.f32 %v337, %v160
    %v380 = vmul.f32 %v340, %v160
    %v381 = vmul.f32 %v343, %v160
    %v382 = vmul.f32 %v346, %v160
    %v383 = vmul.f32 %v349, %v160
    %v384 = vmul.f32 %v352, %v160
    %v385 = vadd.f32 %v353, 1e-05
    %v386 = vadd.f32 %v354, 1e-05
    %v387 = vadd.f32 %v355, 1e-05
    %v388 = vadd.f32 %v356, 1e-05
    %v389 = vadd.f32 %v357, 1e-05
    %v390 = vadd.f32 %v358, 1e-05
    %v391 = vadd.f32 %v359, 1e-05
    %v392 = vadd.f32 %v360, 1e-05
    %v393 = vadd.f32 %v361, 1e-05
    %v394 = vadd.f32 %v362, 1e-05
    %v395 = vadd.f32 %v363, 1e-05
    %v396 = vadd.f32 %v364, 1e-05
    %v397 = vadd.f32 %v365, 1e-05
    %v398 = vadd.f32 %v366, 1e-05
    %v399 = vadd.f32 %v367, 1e-05
    %v400 = vadd.f32 %v368, 1e-05
    %v401 = vadd.f32 %v369, 1e-05
    %v402 = vadd.f32 %v370, 1e-05
    %v403 = vadd.f32 %v371, 1e-05
    %v404 = vadd.f32 %v372, 1e-05
    %v405 = vadd.f32 %v373, 1e-05
    %v406 = vadd.f32 %v374, 1e-05
    %v407 = vadd.f32 %v375, 1e-05
    %v408 = vadd.f32 %v376, 1e-05
    %v409 = vadd.f32 %v377, 1e-05
    %v410 = vadd.f32 %v378, 1e-05
    %v411 = vadd.f32 %v379, 1e-05
    %v412 = vadd.f32 %v380, 1e-05
    %v413 = vadd.f32 %v381, 1e-05
    %v414 = vadd.f32 %v382, 1e-05
    %v415 = vadd.f32 %v383, 1e-05
    %v416 = vadd.f32 %v384, 1e-05
    %v417 = vrsqrt.pop %v385
    %v418 = vrsqrt.pop %v386
    %v419 = vrsqrt.pop %v387
    %v420 = vrsqrt.pop %v388
    %v421 = vrsqrt.pop %v389
    %v422 = vrsqrt.pop %v390
    %v423 = vrsqrt.pop %v391
    %v424 = vrsqrt.pop %v392
    %v425 = vrsqrt.pop %v393
    %v426 = vrsqrt.pop %v394
    %v427 = vrsqrt.pop %v395
    %v428 = vrsqrt.pop %v396
    %v429 = vrsqrt.pop %v397
    %v430 = vrsqrt.pop %v398
    %v431 = vrsqrt.pop %v399
    %v432 = vrsqrt.pop %v400
    %v433 = vrsqrt.pop %v401
    %v434 = vrsqrt.pop %v402
    %v435 = vrsqrt.pop %v403
    %v436 = vrsqrt.pop %v404
    %v437 = vrsqrt.pop %v405
    %v438 = vrsqrt.pop %v406
    %v439 = vrsqrt.pop %v407
    %v440 = vrsqrt.pop %v408
    %v441 = vrsqrt.pop %v409
    %v442 = vrsqrt.pop %v410
    %v443 = vrsqrt.pop %v411
    %v444 = vrsqrt.pop %v412
    %v445 = vrsqrt.pop %v413
    %v446 = vrsqrt.pop %v414
    %v447 = vrsqrt.pop %v415
    %v448 = vrsqrt.pop %v416
    %v449 = vmul.f32 %v193, %v417
    %v450 = vmul.f32 %v194, %v418
    %v451 = vmul.f32 %v195, %v419
    %v452 = vmul.f32 %v196, %v420
    %v453 = vmul.f32 %v197, %v421
    %v454 = vmul.f32 %v198, %v422
    %v455 = vmul.f32 %v199, %v423
    %v456 = vmul.f32 %v200, %v424
    %v457 = vmul.f32 %v201, %v425
    %v458 = vmul.f32 %v202, %v426
    %v459 = vmul.f32 %v203, %v427
    %v460 = vmul.f32 %v204, %v428
    %v461 = vmul.f32 %v205, %v429
    %v462 = vmul.f32 %v206, %v430
    %v463 = vmul.f32 %v207, %v431
    %v464 = vmul.f32 %v208, %v432
    %v465 = vmul.f32 %v209, %v433
    %v466 = vmul.f32 %v210, %v434
    %v467 = vmul.f32 %v211, %v435
    %v468 = vmul.f32 %v212, %v436
    %v469 = vmul.f32 %v213, %v437
    %v470 = vmul.f32 %v214, %v438
    %v471 = vmul.f32 %v215, %v439
    %v472 = vmul.f32 %v216, %v440
    %v473 = vmul.f32 %v217, %v441
    %v474 = vmul.f32 %v218, %v442
    %v475 = vmul.f32 %v219, %v443
    %v476 = vmul.f32 %v220, %v444
    %v477 = vmul.f32 %v221, %v445
    %v478 = vmul.f32 %v222, %v446
    %v479 = vmul.f32 %v223, %v447
    %v480 = vmul.f32 %v224, %v448
    %v481 = vld [vmem:[%s5] sm:$0x1]
    %v483 = vlaneseq
    %v484 = vshrl.u32 %v483, 7
    %v485 = vsub.s32 0, %v484
    %v486 = vrot.slane %v481, %v485
    %v488 = vmul.f32 %v449, %v486
    %v489 = vmul.f32 %v450, %v486
    %v490 = vmul.f32 %v451, %v486
    %v491 = vmul.f32 %v452, %v486
    %v492 = vmul.f32 %v453, %v486
    %v493 = vmul.f32 %v454, %v486
    %v494 = vmul.f32 %v455, %v486
    %v495 = vmul.f32 %v456, %v486
    %v496 = vmul.f32 %v457, %v486
    %v497 = vmul.f32 %v458, %v486
    %v498 = vmul.f32 %v459, %v486
    %v499 = vmul.f32 %v460, %v486
    %v500 = vmul.f32 %v461, %v486
    %v501 = vmul.f32 %v462, %v486
    %v502 = vmul.f32 %v463, %v486
    %v503 = vmul.f32 %v464, %v486
    %v504 = vmul.f32 %v465, %v486
    %v505 = vmul.f32 %v466, %v486
    %v506 = vmul.f32 %v467, %v486
    %v507 = vmul.f32 %v468, %v486
    %v508 = vmul.f32 %v469, %v486
    %v509 = vmul.f32 %v470, %v486
    %v510 = vmul.f32 %v471, %v486
    %v511 = vmul.f32 %v472, %v486
    %v512 = vmul.f32 %v473, %v486
    %v513 = vmul.f32 %v474, %v486
    %v514 = vmul.f32 %v475, %v486
    %v515 = vmul.f32 %v476, %v486
    %v516 = vmul.f32 %v477, %v486
    %v517 = vmul.f32 %v478, %v486
    %v518 = vmul.f32 %v479, %v486
    %v519 = vmul.f32 %v480, %v486
    %v520 = vld [vmem:[%s6] sm:$0x1]
    %v522 = vlaneseq
    %v523 = vshrl.u32 %v522, 7
    %v524 = vsub.s32 0, %v523
    %v525 = vrot.slane %v520, %v524
    %v527 = vadd.f32 %v488, %v525
    %v528 = vadd.f32 %v489, %v525
    %v529 = vadd.f32 %v490, %v525
    %v530 = vadd.f32 %v491, %v525
    %v531 = vadd.f32 %v492, %v525
    %v532 = vadd.f32 %v493, %v525
    %v533 = vadd.f32 %v494, %v525
    %v534 = vadd.f32 %v495, %v525
    %v535 = vadd.f32 %v496, %v525
    %v536 = vadd.f32 %v497, %v525
    %v537 = vadd.f32 %v498, %v525
    %v538 = vadd.f32 %v499, %v525
    %v539 = vadd.f32 %v500, %v525
    %v540 = vadd.f32 %v501, %v525
    %v541 = vadd.f32 %v502, %v525
    %v542 = vadd.f32 %v503, %v525
    %v543 = vadd.f32 %v504, %v525
    %v544 = vadd.f32 %v505, %v525
    %v545 = vadd.f32 %v506, %v525
    %v546 = vadd.f32 %v507, %v525
    %v547 = vadd.f32 %v508, %v525
    %v548 = vadd.f32 %v509, %v525
    %v549 = vadd.f32 %v510, %v525
    %v550 = vadd.f32 %v511, %v525
    %v551 = vadd.f32 %v512, %v525
    %v552 = vadd.f32 %v513, %v525
    %v553 = vadd.f32 %v514, %v525
    %v554 = vadd.f32 %v515, %v525
    %v555 = vadd.f32 %v516, %v525
    %v556 = vadd.f32 %v517, %v525
    %v557 = vadd.f32 %v518, %v525
    %v558 = vadd.f32 %v519, %v525
    %v559 = vpack.c.bf16 %v528, %v527
    %v560 = vpack.c.bf16 %v530, %v529
    %v561 = vpack.c.bf16 %v532, %v531
    %v562 = vpack.c.bf16 %v534, %v533
    %v563 = vpack.c.bf16 %v536, %v535
    %v564 = vpack.c.bf16 %v538, %v537
    %v565 = vpack.c.bf16 %v540, %v539
    %v566 = vpack.c.bf16 %v542, %v541
    %v567 = vpack.c.bf16 %v544, %v543
    %v568 = vpack.c.bf16 %v546, %v545
    %v569 = vpack.c.bf16 %v548, %v547
    %v570 = vpack.c.bf16 %v550, %v549
    %v571 = vpack.c.bf16 %v552, %v551
    %v572 = vpack.c.bf16 %v554, %v553
    %v573 = vpack.c.bf16 %v556, %v555
    %v574 = vpack.c.bf16 %v558, %v557
    %575 = vst.msk [vmem:[#allocation2] sm:$0xff] %vm63, %v559
    %576 = vst.msk [vmem:[#allocation2 + $0x8] sm:$0xff] %vm63, %v560
    %577 = vst.msk [vmem:[#allocation2 + $0x10] sm:$0xff] %vm63, %v561
    %578 = vst.msk [vmem:[#allocation2 + $0x18] sm:$0xff] %vm63, %v562
    %579 = vst.msk [vmem:[#allocation2 + $0x20] sm:$0xff] %vm63, %v563
    %580 = vst.msk [vmem:[#allocation2 + $0x28] sm:$0xff] %vm63, %v564
    %581 = vst.msk [vmem:[#allocation2 + $0x30] sm:$0xff] %vm63, %v565
    %582 = vst.msk [vmem:[#allocation2 + $0x38] sm:$0xff] %vm63, %v566
    %583 = vst.msk [vmem:[#allocation2 + $0x40] sm:$0xff] %vm63, %v567
    %584 = vst.msk [vmem:[#allocation2 + $0x48] sm:$0xff] %vm63, %v568
    %585 = vst.msk [vmem:[#allocation2 + $0x50] sm:$0xff] %vm63, %v569
    %586 = vst.msk [vmem:[#allocation2 + $0x58] sm:$0xff] %vm63, %v570
    %587 = vst.msk [vmem:[#allocation2 + $0x60] sm:$0xff] %vm63, %v571
    %588 = vst.msk [vmem:[#allocation2 + $0x68] sm:$0xff] %vm63, %v572
    %589 = vst.msk [vmem:[#allocation2 + $0x70] sm:$0xff] %vm63, %v573
    %590 = vst.msk [vmem:[#allocation2 + $0x78] sm:$0xff] %vm63, %v574
    %591 = vst.msk [vmem:[#allocation3] sm:$0xff] %vm63, 0.0
    %592 = vst.msk [vmem:[#allocation3 + $0x8] sm:$0xff] %vm63, 0.0
    %593 = vst.msk [vmem:[#allocation3 + $0x10] sm:$0xff] %vm63, 0.0
    %594 = vst.msk [vmem:[#allocation3 + $0x18] sm:$0xff] %vm63, 0.0
    %595 = vst.msk [vmem:[#allocation3 + $0x20] sm:$0xff] %vm63, 0.0
    %596 = vst.msk [vmem:[#allocation3 + $0x28] sm:$0xff] %vm63, 0.0
    %597 = vst.msk [vmem:[#allocation3 + $0x30] sm:$0xff] %vm63, 0.0
    %598 = vst.msk [vmem:[#allocation3 + $0x38] sm:$0xff] %vm63, 0.0
    %599 = vst.msk [vmem:[#allocation3 + $0x40] sm:$0xff] %vm63, 0.0
    %600 = vst.msk [vmem:[#allocation3 + $0x48] sm:$0xff] %vm63, 0.0
    %601 = vst.msk [vmem:[#allocation3 + $0x50] sm:$0xff] %vm63, 0.0
    %602 = vst.msk [vmem:[#allocation3 + $0x58] sm:$0xff] %vm63, 0.0
    %603 = vst.msk [vmem:[#allocation3 + $0x60] sm:$0xff] %vm63, 0.0
    %604 = vst.msk [vmem:[#allocation3 + $0x68] sm:$0xff] %vm63, 0.0
    %605 = vst.msk [vmem:[#allocation3 + $0x70] sm:$0xff] %vm63, 0.0
    %606 = vst.msk [vmem:[#allocation3 + $0x78] sm:$0xff] %vm63, 0.0
    %607 = vst.msk [vmem:[#allocation3 + $0x80] sm:$0xff] %vm63, 0.0
    %608 = vst.msk [vmem:[#allocation3 + $0x88] sm:$0xff] %vm63, 0.0
    %609 = vst.msk [vmem:[#allocation3 + $0x90] sm:$0xff] %vm63, 0.0
    %610 = vst.msk [vmem:[#allocation3 + $0x98] sm:$0xff] %vm63, 0.0
    %611 = vst.msk [vmem:[#allocation3 + $0xa0] sm:$0xff] %vm63, 0.0
    %612 = vst.msk [vmem:[#allocation3 + $0xa8] sm:$0xff] %vm63, 0.0
    %613 = vst.msk [vmem:[#allocation3 + $0xb0] sm:$0xff] %vm63, 0.0
    %614 = vst.msk [vmem:[#allocation3 + $0xb8] sm:$0xff] %vm63, 0.0
    %615 = vst.msk [vmem:[#allocation3 + $0xc0] sm:$0xff] %vm63, 0.0
    %616 = vst.msk [vmem:[#allocation3 + $0xc8] sm:$0xff] %vm63, 0.0
    %617 = vst.msk [vmem:[#allocation3 + $0xd0] sm:$0xff] %vm63, 0.0
    %618 = vst.msk [vmem:[#allocation3 + $0xd8] sm:$0xff] %vm63, 0.0
    %619 = vst.msk [vmem:[#allocation3 + $0xe0] sm:$0xff] %vm63, 0.0
    %620 = vst.msk [vmem:[#allocation3 + $0xe8] sm:$0xff] %vm63, 0.0
    %621 = vst.msk [vmem:[#allocation3 + $0xf0] sm:$0xff] %vm63, 0.0
    %622 = vst.msk [vmem:[#allocation3 + $0xf8] sm:$0xff] %vm63, 0.0
  $region33: #{tpu_custom_call.1} parent=0 // pred_fallthru
    _
  %v623 = vld [vmem:[#allocation2] sm:$0xff]
  %v624 = vld [vmem:[#allocation2 + $0x8] sm:$0xff]
  %v625 = vld [vmem:[#allocation2 + $0x10] sm:$0xff]
  %v626 = vld [vmem:[#allocation2 + $0x18] sm:$0xff]
  %v627 = vld [vmem:[#allocation2 + $0x20] sm:$0xff]
  %v628 = vld [vmem:[#allocation2 + $0x28] sm:$0xff]
  %v629 = vld [vmem:[#allocation2 + $0x30] sm:$0xff]
  %v630 = vld [vmem:[#allocation2 + $0x38] sm:$0xff]
  %v631 = vld [vmem:[#allocation2 + $0x40] sm:$0xff]
  %v632 = vld [vmem:[#allocation2 + $0x48] sm:$0xff]
  %v633 = vld [vmem:[#allocation2 + $0x50] sm:$0xff]
  %v634 = vld [vmem:[#allocation2 + $0x58] sm:$0xff]
  %v635 = vld [vmem:[#allocation2 + $0x60] sm:$0xff]
  %v636 = vld [vmem:[#allocation2 + $0x68] sm:$0xff]
  %v637 = vld [vmem:[#allocation2 + $0x70] sm:$0xff]
  %v638 = vld [vmem:[#allocation2 + $0x78] sm:$0xff]
  %v639 = vld [vmem:[%s1] sm:$0xf]
  %v640 = vld [vmem:[%s1 + $0x4] sm:$0xf]
  %v641 = vld [vmem:[%s1 + $0x8] sm:$0xf]
  %v642 = vld [vmem:[%s1 + $0xc] sm:$0xf]
  %v643 = vld [vmem:[%s2] sm:$0x1]
  %v645 = vlaneseq
  %v646 = vshrl.u32 %v645, 7
  %v647 = vsub.s32 0, %v646
  %v648 = vrot.slane %v643, %v647
  %v654 = vunpack.c.l.b16 %v639
  %v655 = vunpack.c.l.b16 %v640
  %v656 = vunpack.c.l.b16 %v641
  %v657 = vunpack.c.l.b16 %v642
  %v658 = vpack.c.b16 %v655, %v654
  %v659 = vpack.c.b16 %v657, %v656
  %vm662 = vcmask 261120
  %v664 = vsel %vm662, %v623, 0
  %v667 = vsel %vm662, %v624, 0
  %v670 = vsel %vm662, %v625, 0
  %v673 = vsel %vm662, %v626, 0
  %v676 = vsel %vm662, %v627, 0
  %v679 = vsel %vm662, %v628, 0
  %v682 = vsel %vm662, %v629, 0
  %v685 = vsel %vm662, %v630, 0
  %v688 = vsel %vm662, %v631, 0
  %v691 = vsel %vm662, %v632, 0
  %v694 = vsel %vm662, %v633, 0
  %v697 = vsel %vm662, %v634, 0
  %v700 = vsel %vm662, %v635, 0
  %v703 = vsel %vm662, %v636, 0
  %v706 = vsel %vm662, %v637, 0
  %v709 = vsel %vm662, %v638, 0
  %711 = vmatprep.subr.bf16.mxu0 0
  %712 = vmatpush1.bf16.msra.mxu0 %v658
  %713 = vmatprep.subr.bf16.mxu0 0
  %714 = vmatpush1.bf16.msra.mxu0 %v659
  %715 = vmatprep.subr.bf16.mxu0 0
  %716 = vmatpush1.bf16.msra.mxu0 0
  %717 = vmatprep.subr.bf16.mxu0 0
  %718 = vmatpush1.bf16.msra.mxu0 0
  %719 = vmatprep.subr.bf16.mxu0 0
  %720 = vmatpush1.bf16.msra.mxu0 0
  %721 = vmatprep.subr.bf16.mxu0 0
  %722 = vmatpush1.bf16.msra.mxu0 0
  %723 = vmatprep.subr.bf16.mxu0 0
  %724 = vmatpush1.bf16.msra.mxu0 0
  %725 = vmatprep.subr.bf16.mxu0 0
  %726 = vmatpush1.bf16.msra.mxu0 0
  %727 = vmatprep.subr.bf16.mxu0 0
  %728 = vmatpush1.bf16.msra.mxu0 0
  %729 = vmatprep.subr.bf16.mxu0 0
  %730 = vmatpush1.bf16.msra.mxu0 0
  %731 = vmatprep.subr.bf16.mxu0 0
  %732 = vmatpush1.bf16.msra.mxu0 0
  %733 = vmatprep.subr.bf16.mxu0 0
  %734 = vmatpush1.bf16.msra.mxu0 0
  %735 = vmatprep.subr.bf16.mxu0 0
  %736 = vmatpush1.bf16.msra.mxu0 0
  %737 = vmatprep.subr.bf16.mxu0 0
  %738 = vmatpush1.bf16.msra.mxu0 0
  %739 = vmatprep.subr.bf16.mxu0 0
  %740 = vmatpush1.bf16.msra.mxu0 0
  %741 = vmatprep.subr.bf16.mxu0 0
  %742 = vmatpush1.bf16.msra.mxu0 0
  %743 = vmatprep.mubr.bf16.mxu0 0
  %744 = vmatmul.mubr.bf16.gmra.mrb[0].mxu0 %v664
  %v745 = vpop.f32.mrb[0].mxu0
  %v746 = vadd.f32 %v648, %v745
  %v747 = vpop.f32.mrb[0].mxu0
  %v748 = vpop.f32.mrb[0].mxu0
  %v749 = vadd.f32 %v648, %v748
  %v750 = vpop.f32.mrb[0].mxu0
  %751 = vmatprep.mubr.bf16.mxu0 0
  %752 = vmatmul.mubr.bf16.gmra.mrb[0].mxu0 %v667
  %v753 = vpop.f32.mrb[0].mxu0
  %v754 = vadd.f32 %v648, %v753
  %v755 = vpop.f32.mrb[0].mxu0
  %v756 = vpop.f32.mrb[0].mxu0
  %v757 = vadd.f32 %v648, %v756
  %v758 = vpop.f32.mrb[0].mxu0
  %759 = vmatprep.mubr.bf16.mxu0 0
  %760 = vmatmul.mubr.bf16.gmra.mrb[0].mxu0 %v670
  %v761 = vpop.f32.mrb[0].mxu0
  %v762 = vadd.f32 %v648, %v761
  %v763 = vpop.f32.mrb[0].mxu0
  %v764 = vpop.f32.mrb[0].mxu0
  %v765 = vadd.f32 %v648, %v764
  %v766 = vpop.f32.mrb[0].mxu0
  %767 = vmatprep.mubr.bf16.mxu0 0
  %768 = vmatmul.mubr.bf16.gmra.mrb[0].mxu0 %v673
  %v769 = vpop.f32.mrb[0].mxu0
  %v770 = vadd.f32 %v648, %v769
  %v771 = vpop.f32.mrb[0].mxu0
  %v772 = vpop.f32.mrb[0].mxu0
  %v773 = vadd.f32 %v648, %v772
  %v774 = vpop.f32.mrb[0].mxu0
  %775 = vmatprep.mubr.bf16.mxu0 0
  %776 = vmatmul.mubr.bf16.gmra.mrb[0].mxu0 %v676
  %v777 = vpop.f32.mrb[0].mxu0
  %v778 = vadd.f32 %v648, %v777
  %v779 = vpop.f32.mrb[0].mxu0
  %v780 = vpop.f32.mrb[0].mxu0
  %v781 = vadd.f32 %v648, %v780
  %v782 = vpop.f32.mrb[0].mxu0
  %783 = vmatprep.mubr.bf16.mxu0 0
  %784 = vmatmul.mubr.bf16.gmra.mrb[0].mxu0 %v679
  %v785 = vpop.f32.mrb[0].mxu0
  %v786 = vadd.f32 %v648, %v785
  %v787 = vpop.f32.mrb[0].mxu0
  %v788 = vpop.f32.mrb[0].mxu0
  %v789 = vadd.f32 %v648, %v788
  %v790 = vpop.f32.mrb[0].mxu0
  %791 = vmatprep.mubr.bf16.mxu0 0
  %792 = vmatmul.mubr.bf16.gmra.mrb[0].mxu0 %v682
  %v793 = vpop.f32.mrb[0].mxu0
  %v794 = vadd.f32 %v648, %v793
  %v795 = vpop.f32.mrb[0].mxu0
  %v796 = vpop.f32.mrb[0].mxu0
  %v797 = vadd.f32 %v648, %v796
  %v798 = vpop.f32.mrb[0].mxu0
  %799 = vmatprep.mubr.bf16.mxu0 0
  %800 = vmatmul.mubr.bf16.gmra.mrb[0].mxu0 %v685
  %v801 = vpop.f32.mrb[0].mxu0
  %v802 = vadd.f32 %v648, %v801
  %v803 = vpop.f32.mrb[0].mxu0
  %v804 = vpop.f32.mrb[0].mxu0
  %v805 = vadd.f32 %v648, %v804
  %v806 = vpop.f32.mrb[0].mxu0
  %807 = vmatprep.mubr.bf16.mxu0 0
  %808 = vmatmul.mubr.bf16.gmra.mrb[0].mxu0 %v688
  %v809 = vpop.f32.mrb[0].mxu0
  %v810 = vadd.f32 %v648, %v809
  %v811 = vpop.f32.mrb[0].mxu0
  %v812 = vpop.f32.mrb[0].mxu0
  %v813 = vadd.f32 %v648, %v812
  %v814 = vpop.f32.mrb[0].mxu0
  %815 = vmatprep.mubr.bf16.mxu0 0
  %816 = vmatmul.mubr.bf16.gmra.mrb[0].mxu0 %v691
  %v817 = vpop.f32.mrb[0].mxu0
  %v818 = vadd.f32 %v648, %v817
  %v819 = vpop.f32.mrb[0].mxu0
  %v820 = vpop.f32.mrb[0].mxu0
  %v821 = vadd.f32 %v648, %v820
  %v822 = vpop.f32.mrb[0].mxu0
  %823 = vmatprep.mubr.bf16.mxu0 0
  %824 = vmatmul.mubr.bf16.gmra.mrb[0].mxu0 %v694
  %v825 = vpop.f32.mrb[0].mxu0
  %v826 = vadd.f32 %v648, %v825
  %v827 = vpop.f32.mrb[0].mxu0
  %v828 = vpop.f32.mrb[0].mxu0
  %v829 = vadd.f32 %v648, %v828
  %v830 = vpop.f32.mrb[0].mxu0
  %831 = vmatprep.mubr.bf16.mxu0 0
  %832 = vmatmul.mubr.bf16.gmra.mrb[0].mxu0 %v697
  %v833 = vpop.f32.mrb[0].mxu0
  %v834 = vadd.f32 %v648, %v833
  %v835 = vpop.f32.mrb[0].mxu0
  %v836 = vpop.f32.mrb[0].mxu0
  %v837 = vadd.f32 %v648, %v836
  %v838 = vpop.f32.mrb[0].mxu0
  %839 = vmatprep.mubr.bf16.mxu0 0
  %840 = vmatmul.mubr.bf16.gmra.mrb[0].mxu0 %v700
  %v841 = vpop.f32.mrb[0].mxu0
  %v842 = vadd.f32 %v648, %v841
  %v843 = vpop.f32.mrb[0].mxu0
  %v844 = vpop.f32.mrb[0].mxu0
  %v845 = vadd.f32 %v648, %v844
  %v846 = vpop.f32.mrb[0].mxu0
  %847 = vmatprep.mubr.bf16.mxu0 0
  %848 = vmatmul.mubr.bf16.gmra.mrb[0].mxu0 %v703
  %v849 = vpop.f32.mrb[0].mxu0
  %v850 = vadd.f32 %v648, %v849
  %v851 = vpop.f32.mrb[0].mxu0
  %v852 = vpop.f32.mrb[0].mxu0
  %v853 = vadd.f32 %v648, %v852
  %v854 = vpop.f32.mrb[0].mxu0
  %855 = vmatprep.mubr.bf16.mxu0 0
  %856 = vmatmul.mubr.bf16.gmra.mrb[0].mxu0 %v706
  %v857 = vpop.f32.mrb[0].mxu0
  %v858 = vadd.f32 %v648, %v857
  %v859 = vpop.f32.mrb[0].mxu0
  %v860 = vpop.f32.mrb[0].mxu0
  %v861 = vadd.f32 %v648, %v860
  %v862 = vpop.f32.mrb[0].mxu0
  %863 = vmatprep.mubr.bf16.mxu0 0
  %864 = vmatmul.mubr.bf16.gmra.mrb[0].mxu0 %v709
  %v865 = vpop.f32.mrb[0].mxu0
  %v866 = vadd.f32 %v648, %v865
  %v867 = vpop.f32.mrb[0].mxu0
  %v868 = vpop.f32.mrb[0].mxu0
  %v869 = vadd.f32 %v648, %v868
  %v870 = vpop.f32.mrb[0].mxu0
  %871 = vdwg.mxu0
  %v872 = vmax.f32 %v746, 0.0
  %v873 = vmax.f32 %v749, 0.0
  %v874 = vmax.f32 %v754, 0.0
  %v875 = vmax.f32 %v757, 0.0
  %v876 = vmax.f32 %v762, 0.0
  %v877 = vmax.f32 %v765, 0.0
  %v878 = vmax.f32 %v770, 0.0
  %v879 = vmax.f32 %v773, 0.0
  %v880 = vmax.f32 %v778, 0.0
  %v881 = vmax.f32 %v781, 0.0
  %v882 = vmax.f32 %v786, 0.0
  %v883 = vmax.f32 %v789, 0.0
  %v884 = vmax.f32 %v794, 0.0
  %v885 = vmax.f32 %v797, 0.0
  %v886 = vmax.f32 %v802, 0.0
  %v887 = vmax.f32 %v805, 0.0
  %v888 = vmax.f32 %v810, 0.0
  %v889 = vmax.f32 %v813, 0.0
  %v890 = vmax.f32 %v818, 0.0
  %v891 = vmax.f32 %v821, 0.0
  %v892 = vmax.f32 %v826, 0.0
  %v893 = vmax.f32 %v829, 0.0
  %v894 = vmax.f32 %v834, 0.0
  %v895 = vmax.f32 %v837, 0.0
  %v896 = vmax.f32 %v842, 0.0
  %v897 = vmax.f32 %v845, 0.0
  %v898 = vmax.f32 %v850, 0.0
  %v899 = vmax.f32 %v853, 0.0
  %v900 = vmax.f32 %v858, 0.0
  %v901 = vmax.f32 %v861, 0.0
  %v902 = vmax.f32 %v866, 0.0
  %v903 = vmax.f32 %v869, 0.0
  %v904 = vld [vmem:[#allocation3] sm:$0xff]
  %v905 = vld [vmem:[#allocation3 + $0x8] sm:$0xff]
  %v906 = vld [vmem:[#allocation3 + $0x10] sm:$0xff]
  %v907 = vld [vmem:[#allocation3 + $0x18] sm:$0xff]
  %v908 = vld [vmem:[#allocation3 + $0x20] sm:$0xff]
  %v909 = vld [vmem:[#allocation3 + $0x28] sm:$0xff]
  %v910 = vld [vmem:[#allocation3 + $0x30] sm:$0xff]
  %v911 = vld [vmem:[#allocation3 + $0x38] sm:$0xff]
  %v912 = vld [vmem:[#allocation3 + $0x40] sm:$0xff]
  %v913 = vld [vmem:[#allocation3 + $0x48] sm:$0xff]
  %v914 = vld [vmem:[#allocation3 + $0x50] sm:$0xff]
  %v915 = vld [vmem:[#allocation3 + $0x58] sm:$0xff]
  %v916 = vld [vmem:[#allocation3 + $0x60] sm:$0xff]
  %v917 = vld [vmem:[#allocation3 + $0x68] sm:$0xff]
  %v918 = vld [vmem:[#allocation3 + $0x70] sm:$0xff]
  %v919 = vld [vmem:[#allocation3 + $0x78] sm:$0xff]
  %v920 = vld [vmem:[#allocation3 + $0x80] sm:$0xff]
  %v921 = vld [vmem:[#allocation3 + $0x88] sm:$0xff]
  %v922 = vld [vmem:[#allocation3 + $0x90] sm:$0xff]
  %v923 = vld [vmem:[#allocation3 + $0x98] sm:$0xff]
  %v924 = vld [vmem:[#allocation3 + $0xa0] sm:$0xff]
  %v925 = vld [vmem:[#allocation3 + $0xa8] sm:$0xff]
  %v926 = vld [vmem:[#allocation3 + $0xb0] sm:$0xff]
  %v927 = vld [vmem:[#allocation3 + $0xb8] sm:$0xff]
  %v928 = vld [vmem:[#allocation3 + $0xc0] sm:$0xff]
  %v929 = vld [vmem:[#allocation3 + $0xc8] sm:$0xff]
  %v930 = vld [vmem:[#allocation3 + $0xd0] sm:$0xff]
  %v931 = vld [vmem:[#allocation3 + $0xd8] sm:$0xff]
  %v932 = vld [vmem:[#allocation3 + $0xe0] sm:$0xff]
  %v933 = vld [vmem:[#allocation3 + $0xe8] sm:$0xff]
  %v934 = vld [vmem:[#allocation3 + $0xf0] sm:$0xff]
  %v935 = vld [vmem:[#allocation3 + $0xf8] sm:$0xff]
  %v936 = vpack.c.bf16 %v873, %v872
  %v937 = vpack.c.bf16 %v875, %v874
  %v938 = vpack.c.bf16 %v877, %v876
  %v939 = vpack.c.bf16 %v879, %v878
  %v940 = vpack.c.bf16 %v881, %v880
  %v941 = vpack.c.bf16 %v883, %v882
  %v942 = vpack.c.bf16 %v885, %v884
  %v943 = vpack.c.bf16 %v887, %v886
  %v944 = vpack.c.bf16 %v889, %v888
  %v945 = vpack.c.bf16 %v891, %v890
  %v946 = vpack.c.bf16 %v893, %v892
  %v947 = vpack.c.bf16 %v895, %v894
  %v948 = vpack.c.bf16 %v897, %v896
  %v949 = vpack.c.bf16 %v899, %v898
  %v950 = vpack.c.bf16 %v901, %v900
  %v951 = vpack.c.bf16 %v903, %v902
  %v952 = vld [vmem:[%s3] sm:$0xf]
  %v953 = vld [vmem:[%s3 + $0x4] sm:$0xf]
  %v954 = vld [vmem:[%s3 + $0x8] sm:$0xf]
  %v955 = vld [vmem:[%s3 + $0xc] sm:$0xf]
  %v956 = vld [vmem:[%s3 + $0x10] sm:$0xf]
  %v957 = vld [vmem:[%s3 + $0x14] sm:$0xf]
  %v958 = vld [vmem:[%s3 + $0x18] sm:$0xf]
  %v959 = vld [vmem:[%s3 + $0x1c] sm:$0xf]
  %v960 = vld [vmem:[%s3 + $0x20] sm:$0xf]
  %v961 = vld [vmem:[%s3 + $0x24] sm:$0xf]
  %v962 = vld [vmem:[%s3 + $0x28] sm:$0xf]
  %v963 = vld [vmem:[%s3 + $0x2c] sm:$0xf]
  %v964 = vld [vmem:[%s3 + $0x30] sm:$0xf]
  %v965 = vld [vmem:[%s3 + $0x34] sm:$0xf]
  %v966 = vld [vmem:[%s3 + $0x38] sm:$0xf]
  %v967 = vld [vmem:[%s3 + $0x3c] sm:$0xf]
  %v984 = vunpack.c.l.b16 %v952
  %v985 = vunpack.c.l.b16 %v953
  %v986 = vunpack.c.l.b16 %v954
  %v987 = vunpack.c.l.b16 %v955
  %v988 = vunpack.c.l.b16 %v956
  %v989 = vunpack.c.l.b16 %v957
  %v990 = vunpack.c.l.b16 %v958
  %v991 = vunpack.c.l.b16 %v959
  %v992 = vunpack.c.l.b16 %v960
  %v993 = vunpack.c.l.b16 %v961
  %v994 = vunpack.c.l.b16 %v962
  %v995 = vunpack.c.l.b16 %v963
  %v996 = vunpack.c.l.b16 %v964
  %v997 = vunpack.c.l.b16 %v965
  %v998 = vunpack.c.l.b16 %v966
  %v999 = vunpack.c.l.b16 %v967
  %v1000 = vpack.c.b16 %v985, %v984
  %v1001 = vpack.c.b16 %v987, %v986
  %v1002 = vpack.c.b16 %v989, %v988
  %v1003 = vpack.c.b16 %v991, %v990
  %v1004 = vpack.c.b16 %v993, %v992
  %v1005 = vpack.c.b16 %v995, %v994
  %v1006 = vpack.c.b16 %v997, %v996
  %v1007 = vpack.c.b16 %v999, %v998
  %1016 = vmatprep.subr.bf16.mxu0 0
  %1017 = vmatpush1.bf16.msra.mxu0 %v1000
  %1018 = vmatprep.subr.bf16.mxu0 0
  %1019 = vmatpush1.bf16.msra.mxu0 %v1001
  %1020 = vmatprep.subr.bf16.mxu0 0
  %1021 = vmatpush1.bf16.msra.mxu0 %v1002
  %1022 = vmatprep.subr.bf16.mxu0 0
  %1023 = vmatpush1.bf16.msra.mxu0 %v1003
  %1024 = vmatprep.subr.bf16.mxu0 0
  %1025 = vmatpush1.bf16.msra.mxu0 %v1004
  %1026 = vmatprep.subr.bf16.mxu0 0
  %1027 = vmatpush1.bf16.msra.mxu0 %v1005
  %1028 = vmatprep.subr.bf16.mxu0 0
  %1029 = vmatpush1.bf16.msra.mxu0 %v1006
  %1030 = vmatprep.subr.bf16.mxu0 0
  %1031 = vmatpush1.bf16.msra.mxu0 %v1007
  %1032 = vmatprep.subr.bf16.mxu0 0
  %1033 = vmatpush1.bf16.msra.mxu0 0
  %1034 = vmatprep.subr.bf16.mxu0 0
  %1035 = vmatpush1.bf16.msra.mxu0 0
  %1036 = vmatprep.subr.bf16.mxu0 0
  %1037 = vmatpush1.bf16.msra.mxu0 0
  %1038 = vmatprep.subr.bf16.mxu0 0
  %1039 = vmatpush1.bf16.msra.mxu0 0
  %1040 = vmatprep.subr.bf16.mxu0 0
  %1041 = vmatpush1.bf16.msra.mxu0 0
  %1042 = vmatprep.subr.bf16.mxu0 0
  %1043 = vmatpush1.bf16.msra.mxu0 0
  %1044 = vmatprep.subr.bf16.mxu0 0
  %1045 = vmatpush1.bf16.msra.mxu0 0
  %1046 = vmatprep.subr.bf16.mxu0 0
  %1047 = vmatpush1.bf16.msra.mxu0 0
  %1048 = vmatprep.mubr.bf16.mxu0 0
  %1049 = vmatmul.mubr.bf16.gmra.mrb[0].mxu0 %v936
  %v1050 = vpop.f32.mrb[0].mxu0
  %v1051 = vadd.f32 0.0, %v1050
  %v1052 = vpop.f32.mrb[0].mxu0
  %v1053 = vpop.f32.mrb[0].mxu0
  %v1054 = vadd.f32 0.0, %v1053
  %v1055 = vpop.f32.mrb[0].mxu0
  %1056 = vmatprep.mubr.bf16.mxu0 0
  %1057 = vmatmul.mubr.bf16.gmra.mrb[0].mxu0 %v937
  %v1058 = vpop.f32.mrb[0].mxu0
  %v1059 = vadd.f32 0.0, %v1058
  %v1060 = vpop.f32.mrb[0].mxu0
  %v1061 = vpop.f32.mrb[0].mxu0
  %v1062 = vadd.f32 0.0, %v1061
  %v1063 = vpop.f32.mrb[0].mxu0
  %1064 = vmatprep.mubr.bf16.mxu0 0
  %1065 = vmatmul.mubr.bf16.gmra.mrb[0].mxu0 %v938
  %v1066 = vpop.f32.mrb[0].mxu0
  %v1067 = vadd.f32 0.0, %v1066
  %v1068 = vpop.f32.mrb[0].mxu0
  %v1069 = vpop.f32.mrb[0].mxu0
  %v1070 = vadd.f32 0.0, %v1069
  %v1071 = vpop.f32.mrb[0].mxu0
  %1072 = vmatprep.mubr.bf16.mxu0 0
  %1073 = vmatmul.mubr.bf16.gmra.mrb[0].mxu0 %v939
  %v1074 = vpop.f32.mrb[0].mxu0
  %v1075 = vadd.f32 0.0, %v1074
  %v1076 = vpop.f32.mrb[0].mxu0
  %v1077 = vpop.f32.mrb[0].mxu0
  %v1078 = vadd.f32 0.0, %v1077
  %v1079 = vpop.f32.mrb[0].mxu0
  %1080 = vmatprep.mubr.bf16.mxu0 0
  %1081 = vmatmul.mubr.bf16.gmra.mrb[0].mxu0 %v940
  %v1082 = vpop.f32.mrb[0].mxu0
  %v1083 = vadd.f32 0.0, %v1082
  %v1084 = vpop.f32.mrb[0].mxu0
  %v1085 = vpop.f32.mrb[0].mxu0
  %v1086 = vadd.f32 0.0, %v1085
  %v1087 = vpop.f32.mrb[0].mxu0
  %1088 = vmatprep.mubr.bf16.mxu0 0
  %1089 = vmatmul.mubr.bf16.gmra.mrb[0].mxu0 %v941
  %v1090 = vpop.f32.mrb[0].mxu0
  %v1091 = vadd.f32 0.0, %v1090
  %v1092 = vpop.f32.mrb[0].mxu0
  %v1093 = vpop.f32.mrb[0].mxu0
  %v1094 = vadd.f32 0.0, %v1093
  %v1095 = vpop.f32.mrb[0].mxu0
  %1096 = vmatprep.mubr.bf16.mxu0 0
  %1097 = vmatmul.mubr.bf16.gmra.mrb[0].mxu0 %v942
  %v1098 = vpop.f32.mrb[0].mxu0
  %v1099 = vadd.f32 0.0, %v1098
  %v1100 = vpop.f32.mrb[0].mxu0
  %v1101 = vpop.f32.mrb[0].mxu0
  %v1102 = vadd.f32 0.0, %v1101
  %v1103 = vpop.f32.mrb[0].mxu0
  %1104 = vmatprep.mubr.bf16.mxu0 0
  %1105 = vmatmul.mubr.bf16.gmra.mrb[0].mxu0 %v943
  %v1106 = vpop.f32.mrb[0].mxu0
  %v1107 = vadd.f32 0.0, %v1106
  %v1108 = vpop.f32.mrb[0].mxu0
  %v1109 = vpop.f32.mrb[0].mxu0
  %v1110 = vadd.f32 0.0, %v1109
  %v1111 = vpop.f32.mrb[0].mxu0
  %1112 = vmatprep.mubr.bf16.mxu0 0
  %1113 = vmatmul.mubr.bf16.gmra.mrb[0].mxu0 %v944
  %v1114 = vpop.f32.mrb[0].mxu0
  %v1115 = vadd.f32 0.0, %v1114
  %v1116 = vpop.f32.mrb[0].mxu0
  %v1117 = vpop.f32.mrb[0].mxu0
  %v1118 = vadd.f32 0.0, %v1117
  %v1119 = vpop.f32.mrb[0].mxu0
  %1120 = vmatprep.mubr.bf16.mxu0 0
  %1121 = vmatmul.mubr.bf16.gmra.mrb[0].mxu0 %v945
  %v1122 = vpop.f32.mrb[0].mxu0
  %v1123 = vadd.f32 0.0, %v1122
  %v1124 = vpop.f32.mrb[0].mxu0
  %v1125 = vpop.f32.mrb[0].mxu0
  %v1126 = vadd.f32 0.0, %v1125
  %v1127 = vpop.f32.mrb[0].mxu0
  %1128 = vmatprep.mubr.bf16.mxu0 0
  %1129 = vmatmul.mubr.bf16.gmra.mrb[0].mxu0 %v946
  %v1130 = vpop.f32.mrb[0].mxu0
  %v1131 = vadd.f32 0.0, %v1130
  %v1132 = vpop.f32.mrb[0].mxu0
  %v1133 = vpop.f32.mrb[0].mxu0
  %v1134 = vadd.f32 0.0, %v1133
  %v1135 = vpop.f32.mrb[0].mxu0
  %1136 = vmatprep.mubr.bf16.mxu0 0
  %1137 = vmatmul.mubr.bf16.gmra.mrb[0].mxu0 %v947
  %v1138 = vpop.f32.mrb[0].mxu0
  %v1139 = vadd.f32 0.0, %v1138
  %v1140 = vpop.f32.mrb[0].mxu0
  %v1141 = vpop.f32.mrb[0].mxu0
  %v1142 = vadd.f32 0.0, %v1141
  %v1143 = vpop.f32.mrb[0].mxu0
  %1144 = vmatprep.mubr.bf16.mxu0 0
  %1145 = vmatmul.mubr.bf16.gmra.mrb[0].mxu0 %v948
  %v1146 = vpop.f32.mrb[0].mxu0
  %v1147 = vadd.f32 0.0, %v1146
  %v1148 = vpop.f32.mrb[0].mxu0
  %v1149 = vpop.f32.mrb[0].mxu0
  %v1150 = vadd.f32 0.0, %v1149
  %v1151 = vpop.f32.mrb[0].mxu0
  %1152 = vmatprep.mubr.bf16.mxu0 0
  %1153 = vmatmul.mubr.bf16.gmra.mrb[0].mxu0 %v949
  %v1154 = vpop.f32.mrb[0].mxu0
  %v1155 = vadd.f32 0.0, %v1154
  %v1156 = vpop.f32.mrb[0].mxu0
  %v1157 = vpop.f32.mrb[0].mxu0
  %v1158 = vadd.f32 0.0, %v1157
  %v1159 = vpop.f32.mrb[0].mxu0
  %1160 = vmatprep.mubr.bf16.mxu0 0
  %1161 = vmatmul.mubr.bf16.gmra.mrb[0].mxu0 %v950
  %v1162 = vpop.f32.mrb[0].mxu0
  %v1163 = vadd.f32 0.0, %v1162
  %v1164 = vpop.f32.mrb[0].mxu0
  %v1165 = vpop.f32.mrb[0].mxu0
  %v1166 = vadd.f32 0.0, %v1165
  %v1167 = vpop.f32.mrb[0].mxu0
  %1168 = vmatprep.mubr.bf16.mxu0 0
  %1169 = vmatmul.mubr.bf16.gmra.mrb[0].mxu0 %v951
  %v1170 = vpop.f32.mrb[0].mxu0
  %v1171 = vadd.f32 0.0, %v1170
  %v1172 = vpop.f32.mrb[0].mxu0
  %v1173 = vpop.f32.mrb[0].mxu0
  %v1174 = vadd.f32 0.0, %v1173
  %v1175 = vpop.f32.mrb[0].mxu0
  %1176 = vdwg.mxu0
  %v1177 = vadd.f32 %v904, %v1051
  %v1178 = vadd.f32 %v905, %v1054
  %v1179 = vadd.f32 %v906, %v1059
  %v1180 = vadd.f32 %v907, %v1062
  %v1181 = vadd.f32 %v908, %v1067
  %v1182 = vadd.f32 %v909, %v1070
  %v1183 = vadd.f32 %v910, %v1075
  %v1184 = vadd.f32 %v911, %v1078
  %v1185 = vadd.f32 %v912, %v1083
  %v1186 = vadd.f32 %v913, %v1086
  %v1187 = vadd.f32 %v914, %v1091
  %v1188 = vadd.f32 %v915, %v1094
  %v1189 = vadd.f32 %v916, %v1099
  %v1190 = vadd.f32 %v917, %v1102
  %v1191 = vadd.f32 %v918, %v1107
  %v1192 = vadd.f32 %v919, %v1110
  %v1193 = vadd.f32 %v920, %v1115
  %v1194 = vadd.f32 %v921, %v1118
  %v1195 = vadd.f32 %v922, %v1123
  %v1196 = vadd.f32 %v923, %v1126
  %v1197 = vadd.f32 %v924, %v1131
  %v1198 = vadd.f32 %v925, %v1134
  %v1199 = vadd.f32 %v926, %v1139
  %v1200 = vadd.f32 %v927, %v1142
  %v1201 = vadd.f32 %v928, %v1147
  %v1202 = vadd.f32 %v929, %v1150
  %v1203 = vadd.f32 %v930, %v1155
  %v1204 = vadd.f32 %v931, %v1158
  %v1205 = vadd.f32 %v932, %v1163
  %v1206 = vadd.f32 %v933, %v1166
  %v1207 = vadd.f32 %v934, %v1171
  %v1208 = vadd.f32 %v935, %v1174
  %1209 = vst.msk [vmem:[#allocation3] sm:$0xff] %vm662, %v1177
  %1210 = vst.msk [vmem:[#allocation3 + $0x8] sm:$0xff] %vm662, %v1178
  %1211 = vst.msk [vmem:[#allocation3 + $0x10] sm:$0xff] %vm662, %v1179
  %1212 = vst.msk [vmem:[#allocation3 + $0x18] sm:$0xff] %vm662, %v1180
  %1213 = vst.msk [vmem:[#allocation3 + $0x20] sm:$0xff] %vm662, %v1181
  %1214 = vst.msk [vmem:[#allocation3 + $0x28] sm:$0xff] %vm662, %v1182
  %1215 = vst.msk [vmem:[#allocation3 + $0x30] sm:$0xff] %vm662, %v1183
  %1216 = vst.msk [vmem:[#allocation3 + $0x38] sm:$0xff] %vm662, %v1184
  %1217 = vst.msk [vmem:[#allocation3 + $0x40] sm:$0xff] %vm662, %v1185
  %1218 = vst.msk [vmem:[#allocation3 + $0x48] sm:$0xff] %vm662, %v1186
  %1219 = vst.msk [vmem:[#allocation3 + $0x50] sm:$0xff] %vm662, %v1187
  %1220 = vst.msk [vmem:[#allocation3 + $0x58] sm:$0xff] %vm662, %v1188
  %1221 = vst.msk [vmem:[#allocation3 + $0x60] sm:$0xff] %vm662, %v1189
  %1222 = vst.msk [vmem:[#allocation3 + $0x68] sm:$0xff] %vm662, %v1190
  %1223 = vst.msk [vmem:[#allocation3 + $0x70] sm:$0xff] %vm662, %v1191
  %1224 = vst.msk [vmem:[#allocation3 + $0x78] sm:$0xff] %vm662, %v1192
  %1225 = vst.msk [vmem:[#allocation3 + $0x80] sm:$0xff] %vm662, %v1193
  %1226 = vst.msk [vmem:[#allocation3 + $0x88] sm:$0xff] %vm662, %v1194
  %1227 = vst.msk [vmem:[#allocation3 + $0x90] sm:$0xff] %vm662, %v1195
  %1228 = vst.msk [vmem:[#allocation3 + $0x98] sm:$0xff] %vm662, %v1196
  %1229 = vst.msk [vmem:[#allocation3 + $0xa0] sm:$0xff] %vm662, %v1197
  %1230 = vst.msk [vmem:[#allocation3 + $0xa8] sm:$0xff] %vm662, %v1198
  %1231 = vst.msk [vmem:[#allocation3 + $0xb0] sm:$0xff] %vm662, %v1199
  %1232 = vst.msk [vmem:[#allocation3 + $0xb8] sm:$0xff] %vm662, %v1200
  %1233 = vst.msk [vmem:[#allocation3 + $0xc0] sm:$0xff] %vm662, %v1201
  %1234 = vst.msk [vmem:[#allocation3 + $0xc8] sm:$0xff] %vm662, %v1202
  %1235 = vst.msk [vmem:[#allocation3 + $0xd0] sm:$0xff] %vm662, %v1203
  %1236 = vst.msk [vmem:[#allocation3 + $0xd8] sm:$0xff] %vm662, %v1204
  %1237 = vst.msk [vmem:[#allocation3 + $0xe0] sm:$0xff] %vm662, %v1205
  %1238 = vst.msk [vmem:[#allocation3 + $0xe8] sm:$0xff] %vm662, %v1206
  %1239 = vst.msk [vmem:[#allocation3 + $0xf0] sm:$0xff] %vm662, %v1207
  %1240 = vst.msk [vmem:[#allocation3 + $0xf8] sm:$0xff] %vm662, %v1208
  // Predicated region
  $region34: #{tpu_custom_call.1} parent=0 // pred_check
    %p1241 = pneg %p27
  $region35: #{tpu_custom_call.1} parent=0 // pred_check_branch
    %1243 = sbr.rel (%p1241) target = $region37
  $region36: #{tpu_custom_call.1} parent=0 // pred_region
    %v1244 = vld [vmem:[%s0] sm:$0xff]
    %v1245 = vld [vmem:[%s0 + $0x8] sm:$0xff]
    %v1246 = vld [vmem:[%s0 + $0x10] sm:$0xff]
    %v1247 = vld [vmem:[%s0 + $0x18] sm:$0xff]
    %v1248 = vld [vmem:[%s0 + $0x20] sm:$0xff]
    %v1249 = vld [vmem:[%s0 + $0x28] sm:$0xff]
    %v1250 = vld [vmem:[%s0 + $0x30] sm:$0xff]
    %v1251 = vld [vmem:[%s0 + $0x38] sm:$0xff]
    %v1252 = vld [vmem:[%s0 + $0x40] sm:$0xff]
    %v1253 = vld [vmem:[%s0 + $0x48] sm:$0xff]
    %v1254 = vld [vmem:[%s0 + $0x50] sm:$0xff]
    %v1255 = vld [vmem:[%s0 + $0x58] sm:$0xff]
    %v1256 = vld [vmem:[%s0 + $0x60] sm:$0xff]
    %v1257 = vld [vmem:[%s0 + $0x68] sm:$0xff]
    %v1258 = vld [vmem:[%s0 + $0x70] sm:$0xff]
    %v1259 = vld [vmem:[%s0 + $0x78] sm:$0xff]
    %v1260 = vld [vmem:[%s0 + $0x80] sm:$0xff]
    %v1261 = vld [vmem:[%s0 + $0x88] sm:$0xff]
    %v1262 = vld [vmem:[%s0 + $0x90] sm:$0xff]
    %v1263 = vld [vmem:[%s0 + $0x98] sm:$0xff]
    %v1264 = vld [vmem:[%s0 + $0xa0] sm:$0xff]
    %v1265 = vld [vmem:[%s0 + $0xa8] sm:$0xff]
    %v1266 = vld [vmem:[%s0 + $0xb0] sm:$0xff]
    %v1267 = vld [vmem:[%s0 + $0xb8] sm:$0xff]
    %v1268 = vld [vmem:[%s0 + $0xc0] sm:$0xff]
    %v1269 = vld [vmem:[%s0 + $0xc8] sm:$0xff]
    %v1270 = vld [vmem:[%s0 + $0xd0] sm:$0xff]
    %v1271 = vld [vmem:[%s0 + $0xd8] sm:$0xff]
    %v1272 = vld [vmem:[%s0 + $0xe0] sm:$0xff]
    %v1273 = vld [vmem:[%s0 + $0xe8] sm:$0xff]
    %v1274 = vld [vmem:[%s0 + $0xf0] sm:$0xff]
    %v1275 = vld [vmem:[%s0 + $0xf8] sm:$0xff]
    %v1276 = vld [vmem:[#allocation3] sm:$0xff]
    %v1277 = vld [vmem:[#allocation3 + $0x8] sm:$0xff]
    %v1278 = vld [vmem:[#allocation3 + $0x10] sm:$0xff]
    %v1279 = vld [vmem:[#allocation3 + $0x18] sm:$0xff]
    %v1280 = vld [vmem:[#allocation3 + $0x20] sm:$0xff]
    %v1281 = vld [vmem:[#allocation3 + $0x28] sm:$0xff]
    %v1282 = vld [vmem:[#allocation3 + $0x30] sm:$0xff]
    %v1283 = vld [vmem:[#allocation3 + $0x38] sm:$0xff]
    %v1284 = vld [vmem:[#allocation3 + $0x40] sm:$0xff]
    %v1285 = vld [vmem:[#allocation3 + $0x48] sm:$0xff]
    %v1286 = vld [vmem:[#allocation3 + $0x50] sm:$0xff]
    %v1287 = vld [vmem:[#allocation3 + $0x58] sm:$0xff]
    %v1288 = vld [vmem:[#allocation3 + $0x60] sm:$0xff]
    %v1289 = vld [vmem:[#allocation3 + $0x68] sm:$0xff]
    %v1290 = vld [vmem:[#allocation3 + $0x70] sm:$0xff]
    %v1291 = vld [vmem:[#allocation3 + $0x78] sm:$0xff]
    %v1292 = vld [vmem:[#allocation3 + $0x80] sm:$0xff]
    %v1293 = vld [vmem:[#allocation3 + $0x88] sm:$0xff]
    %v1294 = vld [vmem:[#allocation3 + $0x90] sm:$0xff]
    %v1295 = vld [vmem:[#allocation3 + $0x98] sm:$0xff]
    %v1296 = vld [vmem:[#allocation3 + $0xa0] sm:$0xff]
    %v1297 = vld [vmem:[#allocation3 + $0xa8] sm:$0xff]
    %v1298 = vld [vmem:[#allocation3 + $0xb0] sm:$0xff]
    %v1299 = vld [vmem:[#allocation3 + $0xb8] sm:$0xff]
    %v1300 = vld [vmem:[#allocation3 + $0xc0] sm:$0xff]
    %v1301 = vld [vmem:[#allocation3 + $0xc8] sm:$0xff]
    %v1302 = vld [vmem:[#allocation3 + $0xd0] sm:$0xff]
    %v1303 = vld [vmem:[#allocation3 + $0xd8] sm:$0xff]
    %v1304 = vld [vmem:[#allocation3 + $0xe0] sm:$0xff]
    %v1305 = vld [vmem:[#allocation3 + $0xe8] sm:$0xff]
    %v1306 = vld [vmem:[#allocation3 + $0xf0] sm:$0xff]
    %v1307 = vld [vmem:[#allocation3 + $0xf8] sm:$0xff]
    %v1308 = vadd.f32 %v1244, %v1276
    %v1309 = vadd.f32 %v1245, %v1277
    %v1310 = vadd.f32 %v1246, %v1278
    %v1311 = vadd.f32 %v1247, %v1279
    %v1312 = vadd.f32 %v1248, %v1280
    %v1313 = vadd.f32 %v1249, %v1281
    %v1314 = vadd.f32 %v1250, %v1282
    %v1315 = vadd.f32 %v1251, %v1283
    %v1316 = vadd.f32 %v1252, %v1284
    %v1317 = vadd.f32 %v1253, %v1285
    %v1318 = vadd.f32 %v1254, %v1286
    %v1319 = vadd.f32 %v1255, %v1287
    %v1320 = vadd.f32 %v1256, %v1288
    %v1321 = vadd.f32 %v1257, %v1289
    %v1322 = vadd.f32 %v1258, %v1290
    %v1323 = vadd.f32 %v1259, %v1291
    %v1324 = vadd.f32 %v1260, %v1292
    %v1325 = vadd.f32 %v1261, %v1293
    %v1326 = vadd.f32 %v1262, %v1294
    %v1327 = vadd.f32 %v1263, %v1295
    %v1328 = vadd.f32 %v1264, %v1296
    %v1329 = vadd.f32 %v1265, %v1297
    %v1330 = vadd.f32 %v1266, %v1298
    %v1331 = vadd.f32 %v1267, %v1299
    %v1332 = vadd.f32 %v1268, %v1300
    %v1333 = vadd.f32 %v1269, %v1301
    %v1334 = vadd.f32 %v1270, %v1302
    %v1335 = vadd.f32 %v1271, %v1303
    %v1336 = vadd.f32 %v1272, %v1304
    %v1337 = vadd.f32 %v1273, %v1305
    %v1338 = vadd.f32 %v1274, %v1306
    %v1339 = vadd.f32 %v1275, %v1307
    %v1340 = vld [vmem:[%s4] sm:$0x1]
    %v1342 = vlaneseq
    %v1343 = vshrl.u32 %v1342, 7
    %v1344 = vsub.s32 0, %v1343
    %v1345 = vrot.slane %v1340, %v1344
    %v1347 = vadd.f32 %v1308, %v1345
    %v1348 = vadd.f32 %v1309, %v1345
    %v1349 = vadd.f32 %v1310, %v1345
    %v1350 = vadd.f32 %v1311, %v1345
    %v1351 = vadd.f32 %v1312, %v1345
    %v1352 = vadd.f32 %v1313, %v1345
    %v1353 = vadd.f32 %v1314, %v1345
    %v1354 = vadd.f32 %v1315, %v1345
    %v1355 = vadd.f32 %v1316, %v1345
    %v1356 = vadd.f32 %v1317, %v1345
    %v1357 = vadd.f32 %v1318, %v1345
    %v1358 = vadd.f32 %v1319, %v1345
    %v1359 = vadd.f32 %v1320, %v1345
    %v1360 = vadd.f32 %v1321, %v1345
    %v1361 = vadd.f32 %v1322, %v1345
    %v1362 = vadd.f32 %v1323, %v1345
    %v1363 = vadd.f32 %v1324, %v1345
    %v1364 = vadd.f32 %v1325, %v1345
    %v1365 = vadd.f32 %v1326, %v1345
    %v1366 = vadd.f32 %v1327, %v1345
    %v1367 = vadd.f32 %v1328, %v1345
    %v1368 = vadd.f32 %v1329, %v1345
    %v1369 = vadd.f32 %v1330, %v1345
    %v1370 = vadd.f32 %v1331, %v1345
    %v1371 = vadd.f32 %v1332, %v1345
    %v1372 = vadd.f32 %v1333, %v1345
    %v1373 = vadd.f32 %v1334, %v1345
    %v1374 = vadd.f32 %v1335, %v1345
    %v1375 = vadd.f32 %v1336, %v1345
    %v1376 = vadd.f32 %v1337, %v1345
    %v1377 = vadd.f32 %v1338, %v1345
    %v1378 = vadd.f32 %v1339, %v1345
    %1379 = vst.msk [vmem:[%s7] sm:$0xff] %vm662, %v1347
    %1380 = vst.msk [vmem:[%s7 + $0x8] sm:$0xff] %vm662, %v1348
    %1381 = vst.msk [vmem:[%s7 + $0x10] sm:$0xff] %vm662, %v1349
    %1382 = vst.msk [vmem:[%s7 + $0x18] sm:$0xff] %vm662, %v1350
    %1383 = vst.msk [vmem:[%s7 + $0x20] sm:$0xff] %vm662, %v1351
    %1384 = vst.msk [vmem:[%s7 + $0x28] sm:$0xff] %vm662, %v1352
    %1385 = vst.msk [vmem:[%s7 + $0x30] sm:$0xff] %vm662, %v1353
    %1386 = vst.msk [vmem:[%s7 + $0x38] sm:$0xff] %vm662, %v1354
    %1387 = vst.msk [vmem:[%s7 + $0x40] sm:$0xff] %vm662, %v1355
    %1388 = vst.msk [vmem:[%s7 + $0x48] sm:$0xff] %vm662, %v1356
    %1389 = vst.msk [vmem:[%s7 + $0x50] sm:$0xff] %vm662, %v1357
    %1390 = vst.msk [vmem:[%s7 + $0x58] sm:$0xff] %vm662, %v1358
    %1391 = vst.msk [vmem:[%s7 + $0x60] sm:$0xff] %vm662, %v1359
    %1392 = vst.msk [vmem:[%s7 + $0x68] sm:$0xff] %vm662, %v1360
    %1393 = vst.msk [vmem:[%s7 + $0x70] sm:$0xff] %vm662, %v1361
    %1394 = vst.msk [vmem:[%s7 + $0x78] sm:$0xff] %vm662, %v1362
    %1395 = vst.msk [vmem:[%s7 + $0x80] sm:$0xff] %vm662, %v1363
    %1396 = vst.msk [vmem:[%s7 + $0x88] sm:$0xff] %vm662, %v1364
    %1397 = vst.msk [vmem:[%s7 + $0x90] sm:$0xff] %vm662, %v1365
    %1398 = vst.msk [vmem:[%s7 + $0x98] sm:$0xff] %vm662, %v1366
    %1399 = vst.msk [vmem:[%s7 + $0xa0] sm:$0xff] %vm662, %v1367
    %1400 = vst.msk [vmem:[%s7 + $0xa8] sm:$0xff] %vm662, %v1368
    %1401 = vst.msk [vmem:[%s7 + $0xb0] sm:$0xff] %vm662, %v1369
    %1402 = vst.msk [vmem:[%s7 + $0xb8] sm:$0xff] %vm662, %v1370
    %1403 = vst.msk [vmem:[%s7 + $0xc0] sm:$0xff] %vm662, %v1371
    %1404 = vst.msk [vmem:[%s7 + $0xc8] sm:$0xff] %vm662, %v1372
    %1405 = vst.msk [vmem:[%s7 + $0xd0] sm:$0xff] %vm662, %v1373
    %1406 = vst.msk [vmem:[%s7 + $0xd8] sm:$0xff] %vm662, %v1374
    %1407 = vst.msk [vmem:[%s7 + $0xe0] sm:$0xff] %vm662, %v1375
    %1408 = vst.msk [vmem:[%s7 + $0xe8] sm:$0xff] %vm662, %v1376
    %1409 = vst.msk [vmem:[%s7 + $0xf0] sm:$0xff] %vm662, %v1377
    %1410 = vst.msk [vmem:[%s7 + $0xf8] sm:$0xff] %vm662, %v1378
  $region37: #{tpu_custom_call.1} parent=0 // pred_fallthru
    _
  // Predicated region
  $region38: #{tpu_custom_call.1} parent=0 // pred_check
    _
  $region39: #{tpu_custom_call.1} parent=0 // pred_check_branch
    %1412 = sbr.rel (0) target = $region41
  $region40: #{tpu_custom_call.1} parent=0 // pred_region
    _
  $region41: #{tpu_custom_call.1} parent=0 // pred_fallthru
    _
  // Predicated region
  $region42: #{tpu_custom_call.1} parent=0 // pred_check
    _
  $region43: #{tpu_custom_call.1} parent=0 // pred_check_branch
    %1414 = sbr.rel (0) target = $region45
  $region44: #{tpu_custom_call.1} parent=0 // pred_region
    _
  $region45: #{tpu_custom_call.1} parent=0 // pred_fallthru
    _

</llo_original>
